<compile_context>
chip_gen: v6e
topology: v6e:2x2x1
jax: 0.10.0
libtpu: 0.0.40
codegen_flags: <defaults>
</compile_context>

<pallas_src>
import numpy as np
import jax
import jax.numpy as jnp
from jax import lax
from jax.experimental import pallas as pl
from jax.experimental.pallas import tpu as pltpu

FILTERS = 32                    # trunk channels
POS = 9                         # 3x3 board cells
WIDTH = POS * FILTERS           # 288 activation lanes per board: lane = pos*32 + c
HEAD_CH = 3                     # [policy0, policy1, value] from the fused 1x1 convs
HEAD_LANES = 32                 # head lanes: pos*3 + head_ch in 0..26, rest zero
OUT_LANES = 128                 # output slab: lanes 0..8 policy, lane 9 value, rest zero
TILE_B = 8                      # sublane-aligned batch tile (grid axis, "parallel")
BN_EPS = 1e-5
LEAKY_SLOPE = 0.1               # nn.LeakyReLU(0.1) in the PyTorch Head


# ------------------------------ Pallas kernel ------------------------------ #

def _fused_forward_kernel(x_ref, wc_ref, bc_ref, wh_ref, bh_ref, wfc_ref, o_ref):
    h = x_ref[...]                                  # (TILE_B, 288) f32
    n_layers = wc_ref.shape[0]                      # 4 = stem + 3 folded-BN blocks

    # Trunk: each conv3x3(pad=1)+[BN]+ReLU is one 288-deep matmul + bias + ReLU.
    for layer in range(n_layers):
        h = jnp.maximum(
            jnp.dot(h, wc_ref[layer], preferred_element_type=jnp.float32)
            + bc_ref[layer], 0.0)

    # Fused policy/value 1x1 convs + LeakyReLU(0.1): lanes pos*3 + {p0, p1, v}.
    hh = jnp.dot(h, wh_ref[...], preferred_element_type=jnp.float32) + bh_ref[...]
    hh = jnp.where(hh >= 0.0, hh, LEAKY_SLOPE * hh)                  # (TILE_B, 32)

    # Fused NCHW flatten + Linear(18,9) & Linear(9,1); tanh only on value lane 9.
    out = jnp.dot(hh, wfc_ref[...], preferred_element_type=jnp.float32)  # (TILE_B, 128)
    col = lax.broadcasted_iota(jnp.int32, out.shape, 1)
    o_ref[...] = jnp.where(col == 9, jnp.tanh(out), out)


def fused_forward(kp, x_rows):
    """Whole network in one pallas_call. x_rows: (B_padded, 288) f32."""
    bp = x_rows.shape[0]
    assert bp % TILE_B == 0

    def full_spec(a):
        nd = a.ndim
        return pl.BlockSpec(a.shape, lambda i, _nd=nd: (0,) * _nd)

    weights = (kp["wc"], kp["bc"], kp["wh"], kp["bh"], kp["wfc"])
    return pl.pallas_call(
        _fused_forward_kernel,
        out_shape=jax.ShapeDtypeStruct((bp, OUT_LANES), jnp.float32),
        grid=(bp // TILE_B,),
        in_specs=[pl.BlockSpec((TILE_B, WIDTH), lambda i: (i, 0))]
                 + [full_spec(a) for a in weights],
        out_specs=pl.BlockSpec((TILE_B, OUT_LANES), lambda i: (i, 0)),
        compiler_params=pltpu.CompilerParams(
            dimension_semantics=("parallel",)),
    )(x_rows, *weights)


# ---------------- one-time, batch-independent parameter folding ------------ #

def fold_params(params):
    """Fold BN into conv weights, bake the 3x3/pad-1 spatial structure into
    (288,288) matrices, and merge both heads.  Batch-independent (~1.4 MB)."""

    def conv_big(w_oihw, scale=None):
        # PyTorch (O, I, 3, 3) -> big[pos_in*32+c_in, pos_out*32+c_out].
        w = np.asarray(w_oihw, np.float32)
        if scale is not None:
            w = w * np.asarray(scale, np.float32)[:, None, None, None]
        o_ch, in_ch = w.shape[0], w.shape[1]
        big = np.zeros((WIDTH, WIDTH), np.float32)
        for yo in range(3):
            for xo in range(3):
                po = yo * 3 + xo
                for ky in range(3):
                    for kx in range(3):
                        yi, xi = yo + ky - 1, xo + kx - 1
                        if 0 <= yi < 3 and 0 <= xi < 3:
                            pi = yi * 3 + xi
                            big[pi * FILTERS: pi * FILTERS + in_ch,
                                po * FILTERS: po * FILTERS + o_ch] = w[:, :, ky, kx].T
        return big

    # Stem: Conv2d(3, 32, 3, pad=1, bias=True).
    ws = [conv_big(params["conv_w"])]
    bs = [np.tile(np.asarray(params["conv_b"], np.float32), POS)]

    # Blocks: Conv2d(32,32,3,bias=False) + BatchNorm2d (eval mode), folded.
    for i in range(3):
        gamma = np.asarray(params[f"block{i}_gamma"], np.float32)
        beta = np.asarray(params[f"block{i}_beta"], np.float32)
        mean = np.asarray(params[f"block{i}_mean"], np.float32)
        var = np.asarray(params[f"block{i}_var"], np.float32)
        scale = gamma / np.sqrt(var + BN_EPS)
        ws.append(conv_big(params[f"block{i}_w"], scale))
        bs.append(np.tile(beta - mean * scale, POS))

    wc = np.stack(ws)                                    # (4, 288, 288)
    bc = np.stack(bs).reshape(4, 1, WIDTH)               # (4, 1, 288)

    # Merged 1x1-conv heads: lane = pos*3 + {0: policy0, 1: policy1, 2: value}.
    hp_w = np.asarray(params["hp_conv_w"], np.float32)[:, :, 0, 0]   # (2, 32)
    hv_w = np.asarray(params["hv_conv_w"], np.float32)[:, :, 0, 0]   # (1, 32)
    head_w = np.concatenate([hp_w, hv_w], axis=0)                    # (3, 32)
    head_b = np.concatenate([np.asarray(params["hp_conv_b"], np.float32),
                             np.asarray(params["hv_conv_b"], np.float32)])  # (3,)
    wh = np.zeros((WIDTH, HEAD_LANES), np.float32)
    bh = np.zeros((1, HEAD_LANES), np.float32)
    for pos in range(POS):
        wh[pos * FILTERS:(pos + 1) * FILTERS,
           pos * HEAD_CH: pos * HEAD_CH + HEAD_CH] = head_w.T
        bh[0, pos * HEAD_CH: pos * HEAD_CH + HEAD_CH] = head_b

    # Combined FC weights with the PyTorch NCHW flatten (index c*9 + pos) baked in.
    hp_fc = np.asarray(params["hp_fc_w"], np.float32)                # (9, 18)
    hv_fc = np.asarray(params["hv_fc_w"], np.float32)                # (1, 9)
    wfc = np.zeros((HEAD_LANES, OUT_LANES), np.float32)
    for pos in range(POS):
        for c in range(2):
            wfc[pos * HEAD_CH + c, 0:9] = hp_fc[:, c * 9 + pos]
        wfc[pos * HEAD_CH + 2, 9] = hv_fc[0, pos]

    raw = dict(wc=wc, bc=bc, wh=wh, bh=bh, wfc=wfc)
    return {k: jnp.asarray(v) for k, v in raw.items()}


# ------------------------------- forward ----------------------------------- #

def forward(kp, x_nchw):
    b = x_nchw.shape[0]
    # NCHW -> (board, pos, channel) -> lane-dense (B, 288) with channels padded.
    h = jnp.transpose(x_nchw, (0, 2, 3, 1)).astype(jnp.float32).reshape(b, POS, 3)
    h = jnp.pad(h, ((0, 0), (0, 0), (0, FILTERS - 3))).reshape(b, WIDTH)
    bp = ((b + TILE_B - 1) // TILE_B) * TILE_B           # pad batch to sublane tile
    h = jnp.pad(h, ((0, bp - b), (0, 0)))
    out = fused_forward(kp, h)                           # (bp, 128) lane-dense slab
    return {"policy": out[:b, :9], "value": out[:b, 9:10]}


# ------------------------- params / pure-JAX reference --------------------- #

def init_params(key):
    ks = jax.random.split(key, 32)
    p = {}
    f = FILTERS
    p["conv_w"] = 0.1 * jax.random.normal(ks[0], (f, 3, 3, 3), jnp.float32)
    p["conv_b"] = 0.1 * jax.random.normal(ks[1], (f,), jnp.float32)
    for i in range(3):
        p[f"block{i}_w"] = 0.1 * jax.random.normal(ks[2 + 5 * i], (f, f, 3, 3), jnp.float32)
        p[f"block{i}_gamma"] = 1.0 + 0.1 * jax.random.normal(ks[3 + 5 * i], (f,), jnp.float32)
        p[f"block{i}_beta"] = 0.1 * jax.random.normal(ks[4 + 5 * i], (f,), jnp.float32)
        p[f"block{i}_mean"] = 0.1 * jax.random.normal(ks[5 + 5 * i], (f,), jnp.float32)
        p[f"block{i}_var"] = 0.5 + jax.random.uniform(ks[6 + 5 * i], (f,), jnp.float32)
    p["hp_conv_w"] = 0.1 * jax.random.normal(ks[17], (2, f, 1, 1), jnp.float32)
    p["hp_conv_b"] = 0.1 * jax.random.normal(ks[18], (2,), jnp.float32)
    p["hp_fc_w"] = 0.1 * jax.random.normal(ks[19], (9, 18), jnp.float32)
    p["hv_conv_w"] = 0.1 * jax.random.normal(ks[20], (1, f, 1, 1), jnp.float32)
    p["hv_conv_b"] = 0.1 * jax.random.normal(ks[21], (1,), jnp.float32)
    p["hv_fc_w"] = 0.1 * jax.random.normal(ks[22], (1, 9), jnp.float32)
    return p


def im2col_3x3(x_nhwc):
    B, H, W, C = x_nhwc.shape
    xp = jnp.pad(x_nhwc, ((0, 0), (1, 1), (1, 1), (0, 0)))
    cols = []
    for dy in range(3):
        for dx in range(3):
            cols.append(xp[:, dy:dy + H, dx:dx + W, :])
    patches = jnp.stack(cols, axis=3)
    return patches.reshape(B * H * W, 9 * C)


def conv3x3_weight_to_matrix(w_oihw):
    c_out, c_in, _, _ = w_oihw.shape
    return jnp.transpose(w_oihw, (2, 3, 1, 0)).reshape(9 * c_in, c_out)


def forward_ref(params, x_nchw):
    B = x_nchw.shape[0]
    f = FILTERS
    h = jnp.transpose(x_nchw, (0, 2, 3, 1))
    h = jnp.maximum(im2col_3x3(h) @ conv3x3_weight_to_matrix(params["conv_w"])
                    + params["conv_b"], 0.0)
    for i in range(3):
        scale = params[f"block{i}_gamma"] / jnp.sqrt(params[f"block{i}_var"] + BN_EPS)
        shift = params[f"block{i}_beta"] - params[f"block{i}_mean"] * scale
        h = jnp.maximum(im2col_3x3(h.reshape(B, 3, 3, f))
                        @ conv3x3_weight_to_matrix(params[f"block{i}_w"]) * scale + shift, 0.0)
    lrelu = lambda z: jnp.where(z >= 0.0, z, LEAKY_SLOPE * z)
    hp = lrelu(h @ params["hp_conv_w"][:, :, 0, 0].T + params["hp_conv_b"])
    hp_flat = jnp.transpose(hp.reshape(B, 9, 2), (0, 2, 1)).reshape(B, 18)
    policy = hp_flat @ params["hp_fc_w"].T
    hv = lrelu(h @ params["hv_conv_w"][:, :, 0, 0].T + params["hv_conv_b"])
    hv_flat = jnp.transpose(hv.reshape(B, 9, 1), (0, 2, 1)).reshape(B, 9)
    value = jnp.tanh(hv_flat @ params["hv_fc_w"].T)
    return {"policy": policy, "value": value}


# --------------------------------- main ------------------------------------ #

if __name__ == "__main__":
    key = jax.random.PRNGKey(0)
    k_param, k_x = jax.random.split(key)
    params = init_params(k_param)

    # TicTacToe input: batch=2, 3 planes, 3x3 board (NCHW, like PyTorch).
    x = jax.random.normal(k_x, (2, 3, 3, 3), jnp.float32)

    kp = fold_params(params)                    # one-time, batch-independent prep
    fwd = jax.jit(forward)
    out = fwd(kp, x)
    out = jax.tree_util.tree_map(jax.block_until_ready, out)

    ref = forward_ref(params, x)
    assert out["policy"].shape == (2, 9) and out["value"].shape == (2, 1)
    assert jnp.allclose(out["policy"], ref["policy"], atol=1e-4, rtol=1e-4)
    assert jnp.allclose(out["value"], ref["value"], atol=1e-4, rtol=1e-4)

    print("KERNEL_OK")
</pallas_src>

<mosaic_0001>
module attributes {stable_mosaic.version = 11 : i64} {
  func.func @_fused_forward_kernel(%arg0: i32, %arg1: memref<8x288xf32, #tpu.memory_space<vmem>>, %arg2: memref<4x288x288xf32, #tpu.memory_space<vmem>>, %arg3: memref<4x1x288xf32, #tpu.memory_space<vmem>>, %arg4: memref<288x32xf32, #tpu.memory_space<vmem>>, %arg5: memref<1x32xf32, #tpu.memory_space<vmem>>, %arg6: memref<32x128xf32, #tpu.memory_space<vmem>>, %arg7: memref<8x128xf32, #tpu.memory_space<vmem>>) attributes {dimension_semantics = [#tpu.dimension_semantics<parallel>], iteration_bounds = array<i64: 1>, scalar_prefetch = 0 : i64, scratch_operands = 0 : i64, tpu.core_type = #tpu.core_type<tc>, window_params = [{transform_indices = @transform_0, window_bounds = array<i64: 8, 288>}, {pipeline_mode = #tpu.pipeline_mode<synchronous>, transform_indices = @transform_1, window_bounds = array<i64: 4, 288, 288>}, {pipeline_mode = #tpu.pipeline_mode<synchronous>, transform_indices = @transform_2, window_bounds = array<i64: 4, 1, 288>}, {pipeline_mode = #tpu.pipeline_mode<synchronous>, transform_indices = @transform_3, window_bounds = array<i64: 288, 32>}, {pipeline_mode = #tpu.pipeline_mode<synchronous>, transform_indices = @transform_4, window_bounds = array<i64: 1, 32>}, {pipeline_mode = #tpu.pipeline_mode<synchronous>, transform_indices = @transform_5, window_bounds = array<i64: 32, 128>}, {transform_indices = @transform_6, window_bounds = array<i64: 8, 128>}]} {
    %c0 = arith.constant 0 : index
    %c0_0 = arith.constant 0 : index
    %0 = vector.load %arg1[%c0, %c0_0] : memref<8x288xf32, #tpu.memory_space<vmem>>, vector<8x288xf32>
    %c0_1 = arith.constant 0 : index
    %c0_2 = arith.constant 0 : index
    %c0_3 = arith.constant 0 : index
    %1 = vector.load %arg2[%c0_1, %c0_2, %c0_3] : memref<4x288x288xf32, #tpu.memory_space<vmem>>, vector<1x288x288xf32>
    %2 = vector.shape_cast %1 : vector<1x288x288xf32> to vector<288x288xf32>
    %cst = arith.constant dense<0.000000e+00> : vector<8x288xf32>
    %3 = tpu.matmul %0, %2, %cst {dimension_numbers = #tpu.dot_dimension_numbers<[1], [0], [0], [1], [0, 0, 1, 1], [], []>} : vector<8x288xf32>, vector<288x288xf32>, vector<8x288xf32> -> vector<8x288xf32>
    %c0_4 = arith.constant 0 : index
    %c0_5 = arith.constant 0 : index
    %c0_6 = arith.constant 0 : index
    %4 = vector.load %arg3[%c0_4, %c0_5, %c0_6] : memref<4x1x288xf32, #tpu.memory_space<vmem>>, vector<1x1x288xf32>
    %5 = vector.shape_cast %4 : vector<1x1x288xf32> to vector<1x288xf32>
    %6 = vector.broadcast %5 : vector<1x288xf32> to vector<8x288xf32>
    %7 = arith.addf %3, %6 : vector<8x288xf32>
    %cst_7 = arith.constant 0.000000e+00 : f32
    %8 = vector.broadcast %cst_7 : f32 to vector<8x288xf32>
    %9 = arith.maximumf %7, %8 : vector<8x288xf32>
    %c1 = arith.constant 1 : index
    %c0_8 = arith.constant 0 : index
    %c0_9 = arith.constant 0 : index
    %10 = vector.load %arg2[%c1, %c0_8, %c0_9] : memref<4x288x288xf32, #tpu.memory_space<vmem>>, vector<1x288x288xf32>
    %11 = vector.shape_cast %10 : vector<1x288x288xf32> to vector<288x288xf32>
    %cst_10 = arith.constant dense<0.000000e+00> : vector<8x288xf32>
    %12 = tpu.matmul %9, %11, %cst_10 {dimension_numbers = #tpu.dot_dimension_numbers<[1], [0], [0], [1], [0, 0, 1, 1], [], []>} : vector<8x288xf32>, vector<288x288xf32>, vector<8x288xf32> -> vector<8x288xf32>
    %c1_11 = arith.constant 1 : index
    %c0_12 = arith.constant 0 : index
    %c0_13 = arith.constant 0 : index
    %13 = vector.load %arg3[%c1_11, %c0_12, %c0_13] : memref<4x1x288xf32, #tpu.memory_space<vmem>>, vector<1x1x288xf32>
    %14 = vector.shape_cast %13 : vector<1x1x288xf32> to vector<1x288xf32>
    %15 = vector.broadcast %14 : vector<1x288xf32> to vector<8x288xf32>
    %16 = arith.addf %12, %15 : vector<8x288xf32>
    %cst_14 = arith.constant 0.000000e+00 : f32
    %17 = vector.broadcast %cst_14 : f32 to vector<8x288xf32>
    %18 = arith.maximumf %16, %17 : vector<8x288xf32>
    %c2 = arith.constant 2 : index
    %c0_15 = arith.constant 0 : index
    %c0_16 = arith.constant 0 : index
    %19 = vector.load %arg2[%c2, %c0_15, %c0_16] : memref<4x288x288xf32, #tpu.memory_space<vmem>>, vector<1x288x288xf32>
    %20 = vector.shape_cast %19 : vector<1x288x288xf32> to vector<288x288xf32>
    %cst_17 = arith.constant dense<0.000000e+00> : vector<8x288xf32>
    %21 = tpu.matmul %18, %20, %cst_17 {dimension_numbers = #tpu.dot_dimension_numbers<[1], [0], [0], [1], [0, 0, 1, 1], [], []>} : vector<8x288xf32>, vector<288x288xf32>, vector<8x288xf32> -> vector<8x288xf32>
    %c2_18 = arith.constant 2 : index
    %c0_19 = arith.constant 0 : index
    %c0_20 = arith.constant 0 : index
    %22 = vector.load %arg3[%c2_18, %c0_19, %c0_20] : memref<4x1x288xf32, #tpu.memory_space<vmem>>, vector<1x1x288xf32>
    %23 = vector.shape_cast %22 : vector<1x1x288xf32> to vector<1x288xf32>
    %24 = vector.broadcast %23 : vector<1x288xf32> to vector<8x288xf32>
    %25 = arith.addf %21, %24 : vector<8x288xf32>
    %cst_21 = arith.constant 0.000000e+00 : f32
    %26 = vector.broadcast %cst_21 : f32 to vector<8x288xf32>
    %27 = arith.maximumf %25, %26 : vector<8x288xf32>
    %c3 = arith.constant 3 : index
    %c0_22 = arith.constant 0 : index
    %c0_23 = arith.constant 0 : index
    %28 = vector.load %arg2[%c3, %c0_22, %c0_23] : memref<4x288x288xf32, #tpu.memory_space<vmem>>, vector<1x288x288xf32>
    %29 = vector.shape_cast %28 : vector<1x288x288xf32> to vector<288x288xf32>
    %cst_24 = arith.constant dense<0.000000e+00> : vector<8x288xf32>
    %30 = tpu.matmul %27, %29, %cst_24 {dimension_numbers = #tpu.dot_dimension_numbers<[1], [0], [0], [1], [0, 0, 1, 1], [], []>} : vector<8x288xf32>, vector<288x288xf32>, vector<8x288xf32> -> vector<8x288xf32>
    %c3_25 = arith.constant 3 : index
    %c0_26 = arith.constant 0 : index
    %c0_27 = arith.constant 0 : index
    %31 = vector.load %arg3[%c3_25, %c0_26, %c0_27] : memref<4x1x288xf32, #tpu.memory_space<vmem>>, vector<1x1x288xf32>
    %32 = vector.shape_cast %31 : vector<1x1x288xf32> to vector<1x288xf32>
    %33 = vector.broadcast %32 : vector<1x288xf32> to vector<8x288xf32>
    %34 = arith.addf %30, %33 : vector<8x288xf32>
    %cst_28 = arith.constant 0.000000e+00 : f32
    %35 = vector.broadcast %cst_28 : f32 to vector<8x288xf32>
    %36 = arith.maximumf %34, %35 : vector<8x288xf32>
    %c0_29 = arith.constant 0 : index
    %c0_30 = arith.constant 0 : index
    %37 = vector.load %arg4[%c0_29, %c0_30] : memref<288x32xf32, #tpu.memory_space<vmem>>, vector<288x32xf32>
    %cst_31 = arith.constant dense<0.000000e+00> : vector<8x32xf32>
    %38 = tpu.matmul %36, %37, %cst_31 {dimension_numbers = #tpu.dot_dimension_numbers<[1], [0], [0], [1], [0, 0, 1, 1], [], []>} : vector<8x288xf32>, vector<288x32xf32>, vector<8x32xf32> -> vector<8x32xf32>
    %c0_32 = arith.constant 0 : index
    %c0_33 = arith.constant 0 : index
    %39 = vector.load %arg5[%c0_32, %c0_33] : memref<1x32xf32, #tpu.memory_space<vmem>>, vector<1x32xf32>
    %40 = vector.broadcast %39 : vector<1x32xf32> to vector<8x32xf32>
    %41 = arith.addf %38, %40 : vector<8x32xf32>
    %cst_34 = arith.constant 0.000000e+00 : f32
    %42 = vector.broadcast %cst_34 : f32 to vector<8x32xf32>
    %43 = arith.cmpf oge, %41, %42 : vector<8x32xf32>
    %cst_35 = arith.constant 1.000000e-01 : f32
    %44 = vector.broadcast %cst_35 : f32 to vector<8x32xf32>
    %45 = arith.mulf %44, %41 : vector<8x32xf32>
    %46 = arith.select %43, %41, %45 : vector<8x32xi1>, vector<8x32xf32>
    %c0_36 = arith.constant 0 : index
    %c0_37 = arith.constant 0 : index
    %47 = vector.load %arg6[%c0_36, %c0_37] : memref<32x128xf32, #tpu.memory_space<vmem>>, vector<32x128xf32>
    %cst_38 = arith.constant dense<0.000000e+00> : vector<8x128xf32>
    %48 = tpu.matmul %46, %47, %cst_38 {dimension_numbers = #tpu.dot_dimension_numbers<[1], [0], [0], [1], [0, 0, 1, 1], [], []>} : vector<8x32xf32>, vector<32x128xf32>, vector<8x128xf32> -> vector<8x128xf32>
    %49 = tpu.iota {dimensions = array<i32: 1>} : vector<8x128xi32>
    %c9_i32 = arith.constant 9 : i32
    %50 = vector.broadcast %c9_i32 : i32 to vector<8x128xi32>
    %51 = arith.cmpi eq, %49, %50 : vector<8x128xi32>
    %52 = math.tanh %48 : vector<8x128xf32>
    %53 = arith.select %51, %52, %48 : vector<8x128xi1>, vector<8x128xf32>
    %c0_39 = arith.constant 0 : index
    %c0_40 = arith.constant 0 : index
    %54 = vector.load %arg7[%c0_39, %c0_40] : memref<8x128xf32, #tpu.memory_space<vmem>>, vector<8x128xf32>
    tpu.vector_store %arg7[%c0_39, %c0_40], %53 {strides = array<i32>} : memref<8x128xf32, #tpu.memory_space<vmem>>, vector<8x128xf32>,
    return
  }
  func.func @transform_0(%arg0: i32) -> (i32, i32) {
    %c0_i32 = arith.constant 0 : i32
    %c0_i32_0 = arith.constant 0 : i32
    return %arg0, %c0_i32 : i32, i32
  }
  func.func @transform_1(%arg0: i32) -> (i32, i32, i32) {
    %c0_i32 = arith.constant 0 : i32
    %c0_i32_0 = arith.constant 0 : i32
    %c0_i32_1 = arith.constant 0 : i32
    %c0_i32_2 = arith.constant 0 : i32
    return %c0_i32, %c0_i32_0, %c0_i32_1 : i32, i32, i32
  }
  func.func @transform_2(%arg0: i32) -> (i32, i32, i32) {
    %c0_i32 = arith.constant 0 : i32
    %c0_i32_0 = arith.constant 0 : i32
    %c0_i32_1 = arith.constant 0 : i32
    %c0_i32_2 = arith.constant 0 : i32
    return %c0_i32, %c0_i32_0, %c0_i32_1 : i32, i32, i32
  }
  func.func @transform_3(%arg0: i32) -> (i32, i32) {
    %c0_i32 = arith.constant 0 : i32
    %c0_i32_0 = arith.constant 0 : i32
    %c0_i32_1 = arith.constant 0 : i32
    return %c0_i32, %c0_i32_0 : i32, i32
  }
  func.func @transform_4(%arg0: i32) -> (i32, i32) {
    %c0_i32 = arith.constant 0 : i32
    %c0_i32_0 = arith.constant 0 : i32
    %c0_i32_1 = arith.constant 0 : i32
    return %c0_i32, %c0_i32_0 : i32, i32
  }
  func.func @transform_5(%arg0: i32) -> (i32, i32) {
    %c0_i32 = arith.constant 0 : i32
    %c0_i32_0 = arith.constant 0 : i32
    %c0_i32_1 = arith.constant 0 : i32
    return %c0_i32, %c0_i32_0 : i32, i32
  }
  func.func @transform_6(%arg0: i32) -> (i32, i32) {
    %c0_i32 = arith.constant 0 : i32
    %c0_i32_0 = arith.constant 0 : i32
    return %arg0, %c0_i32 : i32, i32
  }
}

</mosaic_0001>

<llo_original>
// kernel: forward.1
$region0: #{forward.1}
  #allocation0 [shape = 'u32[]', space=smem, size = 0x4, offset = 0x4, fixed_abs, tag = 'smem constant byte address 0x4 - core index']
  #allocation1 [shape = 'u32[144,128]{1,0:T(1,128)}', space=vmem, size = 0x12000, scoped, tag = 'internal scratch']
  %s0 = inlined_call_operand.vmem [shape: f32[8,288], index: 0, kind: input, shape index: {}]
  %s1 = inlined_call_operand.hbm [shape: f32[4,288,288], index: 1, kind: input, shape index: {}]
  %s2 = inlined_call_operand.hbm [shape: f32[4,1,288], index: 2, kind: input, shape index: {}]
  %s3 = inlined_call_operand.vmem [shape: f32[288,32], index: 3, kind: input, shape index: {}]
  %s4 = inlined_call_operand.hbm [shape: f32[1,32], index: 4, kind: input, shape index: {}]
  %s5 = inlined_call_operand.hbm [shape: f32[32,128], index: 5, kind: input, shape index: {}]
  %s6 = inlined_call_operand.vmem [shape: f32[8,128], index: 6, kind: output, shape index: {}]
  %s7 = sld [smem:[#allocation0]]
  $region50: #{forward.1} parent=0
    _
  %s9 = ssub.s32 1, %s7
  %s10 = scalar_select 0, %s9, %s7
  $region1: #{forward.1} parent=0
    #allocation2 [shape = 'u8[1769472]{0}', space=vmem, size = 0x1b0000, scoped, tag = 'input window, operand 1, single buffered']
    #allocation3 [shape = 's32[1]{0}', space=sflag, size = 0x4, scoped, tag = 'scoped memory for forward.1']
    #allocation4 [shape = 'u8[6144]{0}', space=vmem, size = 0x1800, scoped, tag = 'input window, operand 2, single buffered']
    #allocation5 [shape = 's32[1]{0}', space=sflag, size = 0x4, scoped, tag = 'scoped memory for forward.1']
    #allocation6 [shape = 'u8[512]{0}', space=vmem, size = 0x400, scoped, tag = 'input window, operand 4, single buffered']
    #allocation7 [shape = 'u8[16384]{0}', space=vmem, size = 0x4000, scoped, tag = 'input window, operand 5, single buffered']
    #allocation8 [shape = 's32[1]{0}', space=sflag, size = 0x4, scoped, tag = 'scoped memory for forward.1']
    %11 = vsyncpa [#allocation3], 0
    %12 = vsyncpa [#allocation5], 0
    %13 = vsyncpa [#allocation8], 0
    // Predicated region
    $region2: #{forward.1} parent=1 // pred_check
      _
    $region3: #{forward.1} parent=1 // pred_check_branch
      %15 = sbr.rel (0) target = $region5
    $region4: #{forward.1} parent=1 // pred_region
      _
    $region5: #{forward.1} parent=1 // pred_fallthru
      _
    // Predicated region
    $region6: #{forward.1} parent=1 // pred_check
      _
    $region7: #{forward.1} parent=1 // pred_check_branch
      %17 = sbr.rel (0) target = $region9
    $region8: #{forward.1} parent=1 // pred_region
      %s19 = ssub.s32 55296, 55296
      %20 = vsyncadd [#allocation3], %s19
      %s21 = sshll.u32 [#allocation2], 4
      %s22 = int_to_ptr.vmem [resolvable:$true] %s21
      %27 = dma.hbm_to_vmem [thread:$0]  %s1, 55296, %s22, [#allocation3], 384, 384, 24
    $region9: #{forward.1} parent=1 // pred_fallthru
      _
    // Predicated region
    $region10: #{forward.1} parent=1 // pred_check
      _
    $region11: #{forward.1} parent=1 // pred_check_branch
      %29 = sbr.rel (0) target = $region13
    $region12: #{forward.1} parent=1 // pred_region
      %s31 = ssub.s32 192, 192
      %32 = vsyncadd [#allocation5], %s31
      %s33 = sshll.u32 [#allocation4], 4
      %s34 = int_to_ptr.vmem [resolvable:$true] %s33
      %39 = dma.hbm_to_vmem [thread:$0]  %s2, 192, %s34, [#allocation5], 48, 48, 3
    $region13: #{forward.1} parent=1 // pred_fallthru
      _
    // Predicated region
    $region14: #{forward.1} parent=1 // pred_check
      _
    $region15: #{forward.1} parent=1 // pred_check_branch
      %41 = sbr.rel (0) target = $region17
    $region16: #{forward.1} parent=1 // pred_region
      _
    $region17: #{forward.1} parent=1 // pred_fallthru
      _
    // Predicated region
    $region18: #{forward.1} parent=1 // pred_check
      _
    $region19: #{forward.1} parent=1 // pred_check_branch
      %43 = sbr.rel (0) target = $region21
    $region20: #{forward.1} parent=1 // pred_region
      %s45 = ssub.s32 16, 16
      %46 = vsyncadd [#allocation5], %s45
      %s48 = sshll.u32 [#allocation6], 4
      %s49 = int_to_ptr.vmem [resolvable:$true] %s48
      %51 = dma.hbm_to_vmem [thread:$0]  %s4, 16, %s49, [#allocation5]
    $region21: #{forward.1} parent=1 // pred_fallthru
      _
    // Predicated region
    $region22: #{forward.1} parent=1 // pred_check
      _
    $region23: #{forward.1} parent=1 // pred_check_branch
      %53 = sbr.rel (0) target = $region25
    $region24: #{forward.1} parent=1 // pred_region
      %s55 = ssub.s32 512, 512
      %56 = vsyncadd [#allocation8], %s55
      %s57 = sshll.u32 [#allocation7], 4
      %s58 = int_to_ptr.vmem [resolvable:$true] %s57
      %63 = dma.hbm_to_vmem [thread:$0]  %s5, 512, %s58, [#allocation8], 128, 128, 8
    $region25: #{forward.1} parent=1 // pred_fallthru
      _
    // Predicated region
    $region26: #{forward.1} parent=1 // pred_check
      _
    $region27: #{forward.1} parent=1 // pred_check_branch
      %65 = sbr.rel (0) target = $region29
    $region28: #{forward.1} parent=1 // pred_region
      %66 = dma.done [#allocation3], 55296
    $region29: #{forward.1} parent=1 // pred_fallthru
      _
    // Predicated region
    $region30: #{forward.1} parent=1 // pred_check
      _
    $region31: #{forward.1} parent=1 // pred_check_branch
      %68 = sbr.rel (0) target = $region33
    $region32: #{forward.1} parent=1 // pred_region
      %69 = dma.done [#allocation5], 192
    $region33: #{forward.1} parent=1 // pred_fallthru
      _
    // Predicated region
    $region34: #{forward.1} parent=1 // pred_check
      _
    $region35: #{forward.1} parent=1 // pred_check_branch
      %71 = sbr.rel (0) target = $region37
    $region36: #{forward.1} parent=1 // pred_region
      %72 = dma.done [#allocation5], 16
    $region37: #{forward.1} parent=1 // pred_fallthru
      _
    // Predicated region
    $region38: #{forward.1} parent=1 // pred_check
      _
    $region39: #{forward.1} parent=1 // pred_check_branch
      %74 = sbr.rel (0) target = $region41
    $region40: #{forward.1} parent=1 // pred_region
      %75 = dma.done [#allocation8], 512
    $region41: #{forward.1} parent=1 // pred_fallthru
      _
    %v76 = vld [vmem:[%s0] sm:$0xff]
    %v77 = vld [vmem:[%s0 + $0x8] sm:$0xff]
    %v78 = vld [vmem:[%s0 + $0x10] sm:$0xff]
    %v79 = vld [vmem:[#allocation2] sm:$0xff]
    %v80 = vld [vmem:[#allocation2 + $0x8] sm:$0xff]
    %v81 = vld [vmem:[#allocation2 + $0x10] sm:$0xff]
    %v82 = vld [vmem:[#allocation2 + $0x18] sm:$0xff]
    %v83 = vld [vmem:[#allocation2 + $0x20] sm:$0xff]
    %v84 = vld [vmem:[#allocation2 + $0x28] sm:$0xff]
    %v85 = vld [vmem:[#allocation2 + $0x30] sm:$0xff]
    %v86 = vld [vmem:[#allocation2 + $0x38] sm:$0xff]
    %v87 = vld [vmem:[#allocation2 + $0x40] sm:$0xff]
    %v88 = vld [vmem:[#allocation2 + $0x48] sm:$0xff]
    %v89 = vld [vmem:[#allocation2 + $0x50] sm:$0xff]
    %v90 = vld [vmem:[#allocation2 + $0x58] sm:$0xff]
    %v91 = vld [vmem:[#allocation2 + $0x60] sm:$0xff]
    %v92 = vld [vmem:[#allocation2 + $0x68] sm:$0xff]
    %v93 = vld [vmem:[#allocation2 + $0x70] sm:$0xff]
    %v94 = vld [vmem:[#allocation2 + $0x78] sm:$0xff]
    %v95 = vld [vmem:[#allocation2 + $0x80] sm:$0xff]
    %v96 = vld [vmem:[#allocation2 + $0x88] sm:$0xff]
    %v97 = vld [vmem:[#allocation2 + $0x90] sm:$0xff]
    %v98 = vld [vmem:[#allocation2 + $0x98] sm:$0xff]
    %v99 = vld [vmem:[#allocation2 + $0xa0] sm:$0xff]
    %v100 = vld [vmem:[#allocation2 + $0xa8] sm:$0xff]
    %v101 = vld [vmem:[#allocation2 + $0xb0] sm:$0xff]
    %v102 = vld [vmem:[#allocation2 + $0xb8] sm:$0xff]
    %v103 = vld [vmem:[#allocation2 + $0xc0] sm:$0xff]
    %v104 = vld [vmem:[#allocation2 + $0xc8] sm:$0xff]
    %v105 = vld [vmem:[#allocation2 + $0xd0] sm:$0xff]
    %v106 = vld [vmem:[#allocation2 + $0xd8] sm:$0xff]
    %v107 = vld [vmem:[#allocation2 + $0xe0] sm:$0xff]
    %v108 = vld [vmem:[#allocation2 + $0xe8] sm:$0xff]
    %v109 = vld [vmem:[#allocation2 + $0xf0] sm:$0xff]
    %v110 = vld [vmem:[#allocation2 + $0xf8] sm:$0xff]
    %v111 = vld [vmem:[#allocation2 + $0x100] sm:$0xff]
    %v112 = vld [vmem:[#allocation2 + $0x108] sm:$0xff]
    %v113 = vld [vmem:[#allocation2 + $0x110] sm:$0xff]
    %v114 = vld [vmem:[#allocation2 + $0x118] sm:$0xff]
    %v115 = vld [vmem:[#allocation2 + $0x120] sm:$0xff]
    %v116 = vld [vmem:[#allocation2 + $0x128] sm:$0xff]
    %v117 = vld [vmem:[#allocation2 + $0x130] sm:$0xff]
    %v118 = vld [vmem:[#allocation2 + $0x138] sm:$0xff]
    %v119 = vld [vmem:[#allocation2 + $0x140] sm:$0xff]
    %v120 = vld [vmem:[#allocation2 + $0x148] sm:$0xff]
    %v121 = vld [vmem:[#allocation2 + $0x150] sm:$0xff]
    %v122 = vld [vmem:[#allocation2 + $0x158] sm:$0xff]
    %v123 = vld [vmem:[#allocation2 + $0x160] sm:$0xff]
    %v124 = vld [vmem:[#allocation2 + $0x168] sm:$0xff]
    %v125 = vld [vmem:[#allocation2 + $0x170] sm:$0xff]
    %v126 = vld [vmem:[#allocation2 + $0x178] sm:$0xff]
    %v127 = vld [vmem:[#allocation2 + $0x180] sm:$0xff]
    %v128 = vld [vmem:[#allocation2 + $0x188] sm:$0xff]
    %v129 = vld [vmem:[#allocation2 + $0x190] sm:$0xff]
    %v130 = vld [vmem:[#allocation2 + $0x198] sm:$0xff]
    %v131 = vld [vmem:[#allocation2 + $0x1a0] sm:$0xff]
    %v132 = vld [vmem:[#allocation2 + $0x1a8] sm:$0xff]
    %v133 = vld [vmem:[#allocation2 + $0x1b0] sm:$0xff]
    %v134 = vld [vmem:[#allocation2 + $0x1b8] sm:$0xff]
    %v135 = vld [vmem:[#allocation2 + $0x1c0] sm:$0xff]
    %v136 = vld [vmem:[#allocation2 + $0x1c8] sm:$0xff]
    %v137 = vld [vmem:[#allocation2 + $0x1d0] sm:$0xff]
    %v138 = vld [vmem:[#allocation2 + $0x1d8] sm:$0xff]
    %v139 = vld [vmem:[#allocation2 + $0x1e0] sm:$0xff]
    %v140 = vld [vmem:[#allocation2 + $0x1e8] sm:$0xff]
    %v141 = vld [vmem:[#allocation2 + $0x1f0] sm:$0xff]
    %v142 = vld [vmem:[#allocation2 + $0x1f8] sm:$0xff]
    %v143 = vld [vmem:[#allocation2 + $0x200] sm:$0xff]
    %v144 = vld [vmem:[#allocation2 + $0x208] sm:$0xff]
    %v145 = vld [vmem:[#allocation2 + $0x210] sm:$0xff]
    %v146 = vld [vmem:[#allocation2 + $0x218] sm:$0xff]
    %v147 = vld [vmem:[#allocation2 + $0x220] sm:$0xff]
    %v148 = vld [vmem:[#allocation2 + $0x228] sm:$0xff]
    %v149 = vld [vmem:[#allocation2 + $0x230] sm:$0xff]
    %v150 = vld [vmem:[#allocation2 + $0x238] sm:$0xff]
    %v151 = vld [vmem:[#allocation2 + $0x240] sm:$0xff]
    %v152 = vld [vmem:[#allocation2 + $0x248] sm:$0xff]
    %v153 = vld [vmem:[#allocation2 + $0x250] sm:$0xff]
    %v154 = vld [vmem:[#allocation2 + $0x258] sm:$0xff]
    %v155 = vld [vmem:[#allocation2 + $0x260] sm:$0xff]
    %v156 = vld [vmem:[#allocation2 + $0x268] sm:$0xff]
    %v157 = vld [vmem:[#allocation2 + $0x270] sm:$0xff]
    %v158 = vld [vmem:[#allocation2 + $0x278] sm:$0xff]
    %v159 = vld [vmem:[#allocation2 + $0x280] sm:$0xff]
    %v160 = vld [vmem:[#allocation2 + $0x288] sm:$0xff]
    %v161 = vld [vmem:[#allocation2 + $0x290] sm:$0xff]
    %v162 = vld [vmem:[#allocation2 + $0x298] sm:$0xff]
    %v163 = vld [vmem:[#allocation2 + $0x2a0] sm:$0xff]
    %v164 = vld [vmem:[#allocation2 + $0x2a8] sm:$0xff]
    %v165 = vld [vmem:[#allocation2 + $0x2b0] sm:$0xff]
    %v166 = vld [vmem:[#allocation2 + $0x2b8] sm:$0xff]
    %v167 = vld [vmem:[#allocation2 + $0x2c0] sm:$0xff]
    %v168 = vld [vmem:[#allocation2 + $0x2c8] sm:$0xff]
    %v169 = vld [vmem:[#allocation2 + $0x2d0] sm:$0xff]
    %v170 = vld [vmem:[#allocation2 + $0x2d8] sm:$0xff]
    %v171 = vld [vmem:[#allocation2 + $0x2e0] sm:$0xff]
    %v172 = vld [vmem:[#allocation2 + $0x2e8] sm:$0xff]
    %v173 = vld [vmem:[#allocation2 + $0x2f0] sm:$0xff]
    %v174 = vld [vmem:[#allocation2 + $0x2f8] sm:$0xff]
    %v175 = vld [vmem:[#allocation2 + $0x300] sm:$0xff]
    %v176 = vld [vmem:[#allocation2 + $0x308] sm:$0xff]
    %v177 = vld [vmem:[#allocation2 + $0x310] sm:$0xff]
    %v178 = vld [vmem:[#allocation2 + $0x318] sm:$0xff]
    %v179 = vld [vmem:[#allocation2 + $0x320] sm:$0xff]
    %v180 = vld [vmem:[#allocation2 + $0x328] sm:$0xff]
    %v181 = vld [vmem:[#allocation2 + $0x330] sm:$0xff]
    %v182 = vld [vmem:[#allocation2 + $0x338] sm:$0xff]
    %v183 = vld [vmem:[#allocation2 + $0x340] sm:$0xff]
    %v184 = vld [vmem:[#allocation2 + $0x348] sm:$0xff]
    %v185 = vld [vmem:[#allocation2 + $0x350] sm:$0xff]
    %v186 = vld [vmem:[#allocation2 + $0x358] sm:$0xff]
    %v187 = vld [vmem:[#allocation4] sm:$0x7]
    %v189 = vlaneseq
    %v190 = vshrl.u32 %v189, 7
    %v191 = vsub.s32 0, %v190
    %v192 = vrot.slane %v187, %v191
    %v193 = vlaneseq
    %v194 = vshrl.u32 %v193, 7
    %v195 = vsub.s32 1, %v194
    %v196 = vrot.slane %v187, %v195
    %v197 = vlaneseq
    %v198 = vshrl.u32 %v197, 7
    %v199 = vsub.s32 2, %v198
    %v200 = vrot.slane %v187, %v199
    %vm204 = vcmask 261120
    %v206 = vsel %vm204, %v78, 0
    %208 = vmatprep.subr.mxu0 %v125
    %209 = vmatpush1.msra.mxu0 %v124
    %210 = vmatprep.subr.mxu0 %v122
    %211 = vmatpush1.msra.mxu0 %v121
    %212 = vmatprep.subr.mxu0 %v119
    %213 = vmatpush1.msra.mxu0 %v118
    %214 = vmatprep.subr.mxu0 %v116
    %215 = vmatpush1.msra.mxu0 %v115
    %216 = vmatprep.subr.mxu0 %v113
    %217 = vmatpush1.msra.mxu0 %v112
    %218 = vmatprep.subr.mxu0 %v110
    %219 = vmatpush1.msra.mxu0 %v109
    %220 = vmatprep.subr.mxu0 %v107
    %221 = vmatpush1.msra.mxu0 %v106
    %222 = vmatprep.subr.mxu0 %v104
    %223 = vmatpush1.msra.mxu0 %v103
    %224 = vmatprep.subr.mxu0 %v101
    %225 = vmatpush1.msra.mxu0 %v100
    %226 = vmatprep.subr.mxu0 %v98
    %227 = vmatpush1.msra.mxu0 %v97
    %228 = vmatprep.subr.mxu0 %v95
    %229 = vmatpush1.msra.mxu0 %v94
    %230 = vmatprep.subr.mxu0 %v92
    %231 = vmatpush1.msra.mxu0 %v91
    %232 = vmatprep.subr.mxu0 %v89
    %233 = vmatpush1.msra.mxu0 %v88
    %234 = vmatprep.subr.mxu0 %v86
    %235 = vmatpush1.msra.mxu0 %v85
    %236 = vmatprep.subr.mxu0 %v83
    %237 = vmatpush1.msra.mxu0 %v82
    %238 = vmatprep.subr.mxu0 %v80
    %239 = vmatpush1.msra.mxu0 %v79
    %240 = vmatprep.subr.mxu0 %v173
    %241 = vmatpush2.msra.mxu0 %v172
    %242 = vmatprep.subr.mxu0 %v170
    %243 = vmatpush2.msra.mxu0 %v169
    %244 = vmatprep.subr.mxu0 %v167
    %245 = vmatpush2.msra.mxu0 %v166
    %246 = vmatprep.subr.mxu0 %v164
    %247 = vmatpush2.msra.mxu0 %v163
    %248 = vmatprep.subr.mxu0 %v161
    %249 = vmatpush2.msra.mxu0 %v160
    %250 = vmatprep.subr.mxu0 %v158
    %251 = vmatpush2.msra.mxu0 %v157
    %252 = vmatprep.subr.mxu0 %v155
    %253 = vmatpush2.msra.mxu0 %v154
    %254 = vmatprep.subr.mxu0 %v152
    %255 = vmatpush2.msra.mxu0 %v151
    %256 = vmatprep.subr.mxu0 %v149
    %257 = vmatpush2.msra.mxu0 %v148
    %258 = vmatprep.subr.mxu0 %v146
    %259 = vmatpush2.msra.mxu0 %v145
    %260 = vmatprep.subr.mxu0 %v143
    %261 = vmatpush2.msra.mxu0 %v142
    %262 = vmatprep.subr.mxu0 %v140
    %263 = vmatpush2.msra.mxu0 %v139
    %264 = vmatprep.subr.mxu0 %v137
    %265 = vmatpush2.msra.mxu0 %v136
    %266 = vmatprep.subr.mxu0 %v134
    %267 = vmatpush2.msra.mxu0 %v133
    %268 = vmatprep.subr.mxu0 %v131
    %269 = vmatpush2.msra.mxu0 %v130
    %270 = vmatprep.subr.mxu0 %v128
    %271 = vmatpush2.msra.mxu0 %v127
    %272 = vmatprep.mubr.f32.mxu0 %v77
    %273 = vmatmul.mubr.f32.gmra.mxu0 %v76
    %v274 = vpop.f32.mrf.mxu0
    %v275 = vadd.f32 %v192, %v274
    %v276 = vpop.f32.mrf.mxu0
    %v277 = vadd.f32 %v196, %v276
    %278 = vdwg.mxu0
    %279 = vmatprep.subr.mxu0 0.0
    %280 = vmatpush1.msra.mxu0 0.0
    %281 = vmatprep.subr.mxu0 0.0
    %282 = vmatpush1.msra.mxu0 0.0
    %283 = vmatprep.subr.mxu0 0.0
    %284 = vmatpush1.msra.mxu0 0.0
    %285 = vmatprep.subr.mxu0 0.0
    %286 = vmatpush1.msra.mxu0 0.0
    %287 = vmatprep.subr.mxu0 0.0
    %288 = vmatpush1.msra.mxu0 0.0
    %289 = vmatprep.subr.mxu0 0.0
    %290 = vmatpush1.msra.mxu0 0.0
    %291 = vmatprep.subr.mxu0 0.0
    %292 = vmatpush1.msra.mxu0 0.0
    %293 = vmatprep.subr.mxu0 0.0
    %294 = vmatpush1.msra.mxu0 0.0
    %295 = vmatprep.subr.mxu0 0.0
    %296 = vmatpush1.msra.mxu0 0.0
    %297 = vmatprep.subr.mxu0 0.0
    %298 = vmatpush1.msra.mxu0 0.0
    %299 = vmatprep.subr.mxu0 0.0
    %300 = vmatpush1.msra.mxu0 0.0
    %301 = vmatprep.subr.mxu0 0.0
    %302 = vmatpush1.msra.mxu0 0.0
    %303 = vmatprep.subr.mxu0 %v185
    %304 = vmatpush1.msra.mxu0 %v184
    %305 = vmatprep.subr.mxu0 %v182
    %306 = vmatpush1.msra.mxu0 %v181
    %307 = vmatprep.subr.mxu0 %v179
    %308 = vmatpush1.msra.mxu0 %v178
    %309 = vmatprep.subr.mxu0 %v176
    %310 = vmatpush1.msra.mxu0 %v175
    %311 = vmatprep.subr.mxu0 0.0
    %312 = vmatpush2.msra.mxu0 0.0
    %313 = vmatprep.subr.mxu0 0.0
    %314 = vmatpush2.msra.mxu0 0.0
    %315 = vmatprep.subr.mxu0 0.0
    %316 = vmatpush2.msra.mxu0 0.0
    %317 = vmatprep.subr.mxu0 0.0
    %318 = vmatpush2.msra.mxu0 0.0
    %319 = vmatprep.subr.mxu0 0.0
    %320 = vmatpush2.msra.mxu0 0.0
    %321 = vmatprep.subr.mxu0 0.0
    %322 = vmatpush2.msra.mxu0 0.0
    %323 = vmatprep.subr.mxu0 0.0
    %324 = vmatpush2.msra.mxu0 0.0
    %325 = vmatprep.subr.mxu0 0.0
    %326 = vmatpush2.msra.mxu0 0.0
    %327 = vmatprep.subr.mxu0 0.0
    %328 = vmatpush2.msra.mxu0 0.0
    %329 = vmatprep.subr.mxu0 0.0
    %330 = vmatpush2.msra.mxu0 0.0
    %331 = vmatprep.subr.mxu0 0.0
    %332 = vmatpush2.msra.mxu0 0.0
    %333 = vmatprep.subr.mxu0 0.0
    %334 = vmatpush2.msra.mxu0 0.0
    %335 = vmatprep.subr.mxu0 0.0
    %336 = vmatpush2.msra.mxu0 0.0
    %337 = vmatprep.subr.mxu0 0.0
    %338 = vmatpush2.msra.mxu0 0.0
    %339 = vmatprep.subr.mxu0 0.0
    %340 = vmatpush2.msra.mxu0 0.0
    %341 = vmatprep.subr.mxu0 0.0
    %342 = vmatpush2.msra.mxu0 0.0
    %343 = vmatprep.mubr.f32.mxu0 0.0
    %344 = vmatmul.mubr.f32.gmra.mxu0 %v206
    %v345 = vpop.f32.mrf.mxu0
    %v346 = vadd.f32 %v275, %v345
    %v347 = vpop.f32.mrf.mxu0
    %v348 = vadd.f32 %v277, %v347
    %349 = vdwg.mxu0
    %350 = vmatprep.subr.mxu0 0.0
    %351 = vmatpush1.msra.mxu0 %v126
    %352 = vmatprep.subr.mxu0 0.0
    %353 = vmatpush1.msra.mxu0 %v123
    %354 = vmatprep.subr.mxu0 0.0
    %355 = vmatpush1.msra.mxu0 %v120
    %356 = vmatprep.subr.mxu0 0.0
    %357 = vmatpush1.msra.mxu0 %v117
    %358 = vmatprep.subr.mxu0 0.0
    %359 = vmatpush1.msra.mxu0 %v114
    %360 = vmatprep.subr.mxu0 0.0
    %361 = vmatpush1.msra.mxu0 %v111
    %362 = vmatprep.subr.mxu0 0.0
    %363 = vmatpush1.msra.mxu0 %v108
    %364 = vmatprep.subr.mxu0 0.0
    %365 = vmatpush1.msra.mxu0 %v105
    %366 = vmatprep.subr.mxu0 0.0
    %367 = vmatpush1.msra.mxu0 %v102
    %368 = vmatprep.subr.mxu0 0.0
    %369 = vmatpush1.msra.mxu0 %v99
    %370 = vmatprep.subr.mxu0 0.0
    %371 = vmatpush1.msra.mxu0 %v96
    %372 = vmatprep.subr.mxu0 0.0
    %373 = vmatpush1.msra.mxu0 %v93
    %374 = vmatprep.subr.mxu0 0.0
    %375 = vmatpush1.msra.mxu0 %v90
    %376 = vmatprep.subr.mxu0 0.0
    %377 = vmatpush1.msra.mxu0 %v87
    %378 = vmatprep.subr.mxu0 0.0
    %379 = vmatpush1.msra.mxu0 %v84
    %380 = vmatprep.subr.mxu0 0.0
    %381 = vmatpush1.msra.mxu0 %v81
    %382 = vmatprep.subr.mxu0 0.0
    %383 = vmatpush2.msra.mxu0 %v174
    %384 = vmatprep.subr.mxu0 0.0
    %385 = vmatpush2.msra.mxu0 %v171
    %386 = vmatprep.subr.mxu0 0.0
    %387 = vmatpush2.msra.mxu0 %v168
    %388 = vmatprep.subr.mxu0 0.0
    %389 = vmatpush2.msra.mxu0 %v165
    %390 = vmatprep.subr.mxu0 0.0
    %391 = vmatpush2.msra.mxu0 %v162
    %392 = vmatprep.subr.mxu0 0.0
    %393 = vmatpush2.msra.mxu0 %v159
    %394 = vmatprep.subr.mxu0 0.0
    %395 = vmatpush2.msra.mxu0 %v156
    %396 = vmatprep.subr.mxu0 0.0
    %397 = vmatpush2.msra.mxu0 %v153
    %398 = vmatprep.subr.mxu0 0.0
    %399 = vmatpush2.msra.mxu0 %v150
    %400 = vmatprep.subr.mxu0 0.0
    %401 = vmatpush2.msra.mxu0 %v147
    %402 = vmatprep.subr.mxu0 0.0
    %403 = vmatpush2.msra.mxu0 %v144
    %404 = vmatprep.subr.mxu0 0.0
    %405 = vmatpush2.msra.mxu0 %v141
    %406 = vmatprep.subr.mxu0 0.0
    %407 = vmatpush2.msra.mxu0 %v138
    %408 = vmatprep.subr.mxu0 0.0
    %409 = vmatpush2.msra.mxu0 %v135
    %410 = vmatprep.subr.mxu0 0.0
    %411 = vmatpush2.msra.mxu0 %v132
    %412 = vmatprep.subr.mxu0 0.0
    %413 = vmatpush2.msra.mxu0 %v129
    %414 = vmatprep.mubr.f32.mxu0 %v77
    %415 = vmatmul.mubr.f32.gmra.mxu0 %v76
    %v416 = vpop.f32.mrf.mxu0
    %v417 = vadd.f32 %v200, %v416
    %v418 = vpop.f32.mrf.mxu0
    %419 = vdwg.mxu0
    %420 = vmatprep.subr.mxu0 0.0
    %421 = vmatpush1.msra.mxu0 0.0
    %422 = vmatprep.subr.mxu0 0.0
    %423 = vmatpush1.msra.mxu0 0.0
    %424 = vmatprep.subr.mxu0 0.0
    %425 = vmatpush1.msra.mxu0 0.0
    %426 = vmatprep.subr.mxu0 0.0
    %427 = vmatpush1.msra.mxu0 0.0
    %428 = vmatprep.subr.mxu0 0.0
    %429 = vmatpush1.msra.mxu0 0.0
    %430 = vmatprep.subr.mxu0 0.0
    %431 = vmatpush1.msra.mxu0 0.0
    %432 = vmatprep.subr.mxu0 0.0
    %433 = vmatpush1.msra.mxu0 0.0
    %434 = vmatprep.subr.mxu0 0.0
    %435 = vmatpush1.msra.mxu0 0.0
    %436 = vmatprep.subr.mxu0 0.0
    %437 = vmatpush1.msra.mxu0 0.0
    %438 = vmatprep.subr.mxu0 0.0
    %439 = vmatpush1.msra.mxu0 0.0
    %440 = vmatprep.subr.mxu0 0.0
    %441 = vmatpush1.msra.mxu0 0.0
    %442 = vmatprep.subr.mxu0 0.0
    %443 = vmatpush1.msra.mxu0 0.0
    %444 = vmatprep.subr.mxu0 0.0
    %445 = vmatpush1.msra.mxu0 %v186
    %446 = vmatprep.subr.mxu0 0.0
    %447 = vmatpush1.msra.mxu0 %v183
    %448 = vmatprep.subr.mxu0 0.0
    %449 = vmatpush1.msra.mxu0 %v180
    %450 = vmatprep.subr.mxu0 0.0
    %451 = vmatpush1.msra.mxu0 %v177
    %452 = vmatprep.subr.mxu0 0.0
    %453 = vmatpush2.msra.mxu0 0.0
    %454 = vmatprep.subr.mxu0 0.0
    %455 = vmatpush2.msra.mxu0 0.0
    %456 = vmatprep.subr.mxu0 0.0
    %457 = vmatpush2.msra.mxu0 0.0
    %458 = vmatprep.subr.mxu0 0.0
    %459 = vmatpush2.msra.mxu0 0.0
    %460 = vmatprep.subr.mxu0 0.0
    %461 = vmatpush2.msra.mxu0 0.0
    %462 = vmatprep.subr.mxu0 0.0
    %463 = vmatpush2.msra.mxu0 0.0
    %464 = vmatprep.subr.mxu0 0.0
    %465 = vmatpush2.msra.mxu0 0.0
    %466 = vmatprep.subr.mxu0 0.0
    %467 = vmatpush2.msra.mxu0 0.0
    %468 = vmatprep.subr.mxu0 0.0
    %469 = vmatpush2.msra.mxu0 0.0
    %470 = vmatprep.subr.mxu0 0.0
    %471 = vmatpush2.msra.mxu0 0.0
    %472 = vmatprep.subr.mxu0 0.0
    %473 = vmatpush2.msra.mxu0 0.0
    %474 = vmatprep.subr.mxu0 0.0
    %475 = vmatpush2.msra.mxu0 0.0
    %476 = vmatprep.subr.mxu0 0.0
    %477 = vmatpush2.msra.mxu0 0.0
    %478 = vmatprep.subr.mxu0 0.0
    %479 = vmatpush2.msra.mxu0 0.0
    %480 = vmatprep.subr.mxu0 0.0
    %481 = vmatpush2.msra.mxu0 0.0
    %482 = vmatprep.subr.mxu0 0.0
    %483 = vmatpush2.msra.mxu0 0.0
    %484 = vmatprep.mubr.f32.mxu0 0.0
    %485 = vmatmul.mubr.f32.gmra.mxu0 %v206
    %v486 = vpop.f32.mrf.mxu0
    %v487 = vadd.f32 %v417, %v486
    %v488 = vpop.f32.mrf.mxu0
    %489 = vdwg.mxu0
    %v490 = vmax.f32 %v346, 0.0
    %v491 = vmax.f32 %v348, 0.0
    %v492 = vmax.f32 %v487, 0.0
    %s493 = scalar_lea.vmem [#allocation2], 864
    %v494 = vld [vmem:[%s493] sm:$0xff]
    %v495 = vld [vmem:[%s493 + $0x8] sm:$0xff]
    %v496 = vld [vmem:[%s493 + $0x10] sm:$0xff]
    %v497 = vld [vmem:[%s493 + $0x18] sm:$0xff]
    %v498 = vld [vmem:[%s493 + $0x20] sm:$0xff]
    %v499 = vld [vmem:[%s493 + $0x28] sm:$0xff]
    %v500 = vld [vmem:[%s493 + $0x30] sm:$0xff]
    %v501 = vld [vmem:[%s493 + $0x38] sm:$0xff]
    %v502 = vld [vmem:[%s493 + $0x40] sm:$0xff]
    %v503 = vld [vmem:[%s493 + $0x48] sm:$0xff]
    %v504 = vld [vmem:[%s493 + $0x50] sm:$0xff]
    %v505 = vld [vmem:[%s493 + $0x58] sm:$0xff]
    %v506 = vld [vmem:[%s493 + $0x60] sm:$0xff]
    %v507 = vld [vmem:[%s493 + $0x68] sm:$0xff]
    %v508 = vld [vmem:[%s493 + $0x70] sm:$0xff]
    %v509 = vld [vmem:[%s493 + $0x78] sm:$0xff]
    %v510 = vld [vmem:[%s493 + $0x80] sm:$0xff]
    %v511 = vld [vmem:[%s493 + $0x88] sm:$0xff]
    %v512 = vld [vmem:[%s493 + $0x90] sm:$0xff]
    %v513 = vld [vmem:[%s493 + $0x98] sm:$0xff]
    %v514 = vld [vmem:[%s493 + $0xa0] sm:$0xff]
    %v515 = vld [vmem:[%s493 + $0xa8] sm:$0xff]
    %v516 = vld [vmem:[%s493 + $0xb0] sm:$0xff]
    %v517 = vld [vmem:[%s493 + $0xb8] sm:$0xff]
    %v518 = vld [vmem:[%s493 + $0xc0] sm:$0xff]
    %v519 = vld [vmem:[%s493 + $0xc8] sm:$0xff]
    %v520 = vld [vmem:[%s493 + $0xd0] sm:$0xff]
    %v521 = vld [vmem:[%s493 + $0xd8] sm:$0xff]
    %v522 = vld [vmem:[%s493 + $0xe0] sm:$0xff]
    %v523 = vld [vmem:[%s493 + $0xe8] sm:$0xff]
    %v524 = vld [vmem:[%s493 + $0xf0] sm:$0xff]
    %v525 = vld [vmem:[%s493 + $0xf8] sm:$0xff]
    %v526 = vld [vmem:[%s493 + $0x100] sm:$0xff]
    %v527 = vld [vmem:[%s493 + $0x108] sm:$0xff]
    %v528 = vld [vmem:[%s493 + $0x110] sm:$0xff]
    %v529 = vld [vmem:[%s493 + $0x118] sm:$0xff]
    %v530 = vld [vmem:[%s493 + $0x120] sm:$0xff]
    %v531 = vld [vmem:[%s493 + $0x128] sm:$0xff]
    %v532 = vld [vmem:[%s493 + $0x130] sm:$0xff]
    %v533 = vld [vmem:[%s493 + $0x138] sm:$0xff]
    %v534 = vld [vmem:[%s493 + $0x140] sm:$0xff]
    %v535 = vld [vmem:[%s493 + $0x148] sm:$0xff]
    %v536 = vld [vmem:[%s493 + $0x150] sm:$0xff]
    %v537 = vld [vmem:[%s493 + $0x158] sm:$0xff]
    %v538 = vld [vmem:[%s493 + $0x160] sm:$0xff]
    %v539 = vld [vmem:[%s493 + $0x168] sm:$0xff]
    %v540 = vld [vmem:[%s493 + $0x170] sm:$0xff]
    %v541 = vld [vmem:[%s493 + $0x178] sm:$0xff]
    %v542 = vld [vmem:[%s493 + $0x180] sm:$0xff]
    %v543 = vld [vmem:[%s493 + $0x188] sm:$0xff]
    %v544 = vld [vmem:[%s493 + $0x190] sm:$0xff]
    %v545 = vld [vmem:[%s493 + $0x198] sm:$0xff]
    %v546 = vld [vmem:[%s493 + $0x1a0] sm:$0xff]
    %v547 = vld [vmem:[%s493 + $0x1a8] sm:$0xff]
    %v548 = vld [vmem:[%s493 + $0x1b0] sm:$0xff]
    %v549 = vld [vmem:[%s493 + $0x1b8] sm:$0xff]
    %v550 = vld [vmem:[%s493 + $0x1c0] sm:$0xff]
    %v551 = vld [vmem:[%s493 + $0x1c8] sm:$0xff]
    %v552 = vld [vmem:[%s493 + $0x1d0] sm:$0xff]
    %v553 = vld [vmem:[%s493 + $0x1d8] sm:$0xff]
    %v554 = vld [vmem:[%s493 + $0x1e0] sm:$0xff]
    %v555 = vld [vmem:[%s493 + $0x1e8] sm:$0xff]
    %v556 = vld [vmem:[%s493 + $0x1f0] sm:$0xff]
    %v557 = vld [vmem:[%s493 + $0x1f8] sm:$0xff]
    %v558 = vld [vmem:[%s493 + $0x200] sm:$0xff]
    %v559 = vld [vmem:[%s493 + $0x208] sm:$0xff]
    %v560 = vld [vmem:[%s493 + $0x210] sm:$0xff]
    %v561 = vld [vmem:[%s493 + $0x218] sm:$0xff]
    %v562 = vld [vmem:[%s493 + $0x220] sm:$0xff]
    %v563 = vld [vmem:[%s493 + $0x228] sm:$0xff]
    %v564 = vld [vmem:[%s493 + $0x230] sm:$0xff]
    %v565 = vld [vmem:[%s493 + $0x238] sm:$0xff]
    %v566 = vld [vmem:[%s493 + $0x240] sm:$0xff]
    %v567 = vld [vmem:[%s493 + $0x248] sm:$0xff]
    %v568 = vld [vmem:[%s493 + $0x250] sm:$0xff]
    %v569 = vld [vmem:[%s493 + $0x258] sm:$0xff]
    %v570 = vld [vmem:[%s493 + $0x260] sm:$0xff]
    %v571 = vld [vmem:[%s493 + $0x268] sm:$0xff]
    %v572 = vld [vmem:[%s493 + $0x270] sm:$0xff]
    %v573 = vld [vmem:[%s493 + $0x278] sm:$0xff]
    %v574 = vld [vmem:[%s493 + $0x280] sm:$0xff]
    %v575 = vld [vmem:[%s493 + $0x288] sm:$0xff]
    %v576 = vld [vmem:[%s493 + $0x290] sm:$0xff]
    %v577 = vld [vmem:[%s493 + $0x298] sm:$0xff]
    %v578 = vld [vmem:[%s493 + $0x2a0] sm:$0xff]
    %v579 = vld [vmem:[%s493 + $0x2a8] sm:$0xff]
    %v580 = vld [vmem:[%s493 + $0x2b0] sm:$0xff]
    %v581 = vld [vmem:[%s493 + $0x2b8] sm:$0xff]
    %v582 = vld [vmem:[%s493 + $0x2c0] sm:$0xff]
    %v583 = vld [vmem:[%s493 + $0x2c8] sm:$0xff]
    %v584 = vld [vmem:[%s493 + $0x2d0] sm:$0xff]
    %v585 = vld [vmem:[%s493 + $0x2d8] sm:$0xff]
    %v586 = vld [vmem:[%s493 + $0x2e0] sm:$0xff]
    %v587 = vld [vmem:[%s493 + $0x2e8] sm:$0xff]
    %v588 = vld [vmem:[%s493 + $0x2f0] sm:$0xff]
    %v589 = vld [vmem:[%s493 + $0x2f8] sm:$0xff]
    %v590 = vld [vmem:[%s493 + $0x300] sm:$0xff]
    %v591 = vld [vmem:[%s493 + $0x308] sm:$0xff]
    %v592 = vld [vmem:[%s493 + $0x310] sm:$0xff]
    %v593 = vld [vmem:[%s493 + $0x318] sm:$0xff]
    %v594 = vld [vmem:[%s493 + $0x320] sm:$0xff]
    %v595 = vld [vmem:[%s493 + $0x328] sm:$0xff]
    %v596 = vld [vmem:[%s493 + $0x330] sm:$0xff]
    %v597 = vld [vmem:[%s493 + $0x338] sm:$0xff]
    %v598 = vld [vmem:[%s493 + $0x340] sm:$0xff]
    %v599 = vld [vmem:[%s493 + $0x348] sm:$0xff]
    %v600 = vld [vmem:[%s493 + $0x350] sm:$0xff]
    %v601 = vld [vmem:[%s493 + $0x358] sm:$0xff]
    %s602 = scalar_lea.vmem [#allocation4], 3
    %v603 = vld [vmem:[%s602] sm:$0x7]
    %v605 = vlaneseq
    %v606 = vshrl.u32 %v605, 7
    %v607 = vsub.s32 0, %v606
    %v608 = vrot.slane %v603, %v607
    %v609 = vlaneseq
    %v610 = vshrl.u32 %v609, 7
    %v611 = vsub.s32 1, %v610
    %v612 = vrot.slane %v603, %v611
    %v613 = vlaneseq
    %v614 = vshrl.u32 %v613, 7
    %v615 = vsub.s32 2, %v614
    %v616 = vrot.slane %v603, %v615
    %v621 = vsel %vm204, %v492, 0
    %623 = vmatprep.subr.mxu0 %v540
    %624 = vmatpush1.msra.mxu0 %v539
    %625 = vmatprep.subr.mxu0 %v537
    %626 = vmatpush1.msra.mxu0 %v536
    %627 = vmatprep.subr.mxu0 %v534
    %628 = vmatpush1.msra.mxu0 %v533
    %629 = vmatprep.subr.mxu0 %v531
    %630 = vmatpush1.msra.mxu0 %v530
    %631 = vmatprep.subr.mxu0 %v528
    %632 = vmatpush1.msra.mxu0 %v527
    %633 = vmatprep.subr.mxu0 %v525
    %634 = vmatpush1.msra.mxu0 %v524
    %635 = vmatprep.subr.mxu0 %v522
    %636 = vmatpush1.msra.mxu0 %v521
    %637 = vmatprep.subr.mxu0 %v519
    %638 = vmatpush1.msra.mxu0 %v518
    %639 = vmatprep.subr.mxu0 %v516
    %640 = vmatpush1.msra.mxu0 %v515
    %641 = vmatprep.subr.mxu0 %v513
    %642 = vmatpush1.msra.mxu0 %v512
    %643 = vmatprep.subr.mxu0 %v510
    %644 = vmatpush1.msra.mxu0 %v509
    %645 = vmatprep.subr.mxu0 %v507
    %646 = vmatpush1.msra.mxu0 %v506
    %647 = vmatprep.subr.mxu0 %v504
    %648 = vmatpush1.msra.mxu0 %v503
    %649 = vmatprep.subr.mxu0 %v501
    %650 = vmatpush1.msra.mxu0 %v500
    %651 = vmatprep.subr.mxu0 %v498
    %652 = vmatpush1.msra.mxu0 %v497
    %653 = vmatprep.subr.mxu0 %v495
    %654 = vmatpush1.msra.mxu0 %v494
    %655 = vmatprep.subr.mxu0 %v588
    %656 = vmatpush2.msra.mxu0 %v587
    %657 = vmatprep.subr.mxu0 %v585
    %658 = vmatpush2.msra.mxu0 %v584
    %659 = vmatprep.subr.mxu0 %v582
    %660 = vmatpush2.msra.mxu0 %v581
    %661 = vmatprep.subr.mxu0 %v579
    %662 = vmatpush2.msra.mxu0 %v578
    %663 = vmatprep.subr.mxu0 %v576
    %664 = vmatpush2.msra.mxu0 %v575
    %665 = vmatprep.subr.mxu0 %v573
    %666 = vmatpush2.msra.mxu0 %v572
    %667 = vmatprep.subr.mxu0 %v570
    %668 = vmatpush2.msra.mxu0 %v569
    %669 = vmatprep.subr.mxu0 %v567
    %670 = vmatpush2.msra.mxu0 %v566
    %671 = vmatprep.subr.mxu0 %v564
    %672 = vmatpush2.msra.mxu0 %v563
    %673 = vmatprep.subr.mxu0 %v561
    %674 = vmatpush2.msra.mxu0 %v560
    %675 = vmatprep.subr.mxu0 %v558
    %676 = vmatpush2.msra.mxu0 %v557
    %677 = vmatprep.subr.mxu0 %v555
    %678 = vmatpush2.msra.mxu0 %v554
    %679 = vmatprep.subr.mxu0 %v552
    %680 = vmatpush2.msra.mxu0 %v551
    %681 = vmatprep.subr.mxu0 %v549
    %682 = vmatpush2.msra.mxu0 %v548
    %683 = vmatprep.subr.mxu0 %v546
    %684 = vmatpush2.msra.mxu0 %v545
    %685 = vmatprep.subr.mxu0 %v543
    %686 = vmatpush2.msra.mxu0 %v542
    %687 = vmatprep.mubr.f32.mxu0 %v491
    %688 = vmatmul.mubr.f32.gmra.mxu0 %v490
    %v689 = vpop.f32.mrf.mxu0
    %v690 = vadd.f32 %v608, %v689
    %v691 = vpop.f32.mrf.mxu0
    %v692 = vadd.f32 %v612, %v691
    %693 = vdwg.mxu0
    %694 = vmatprep.subr.mxu0 0.0
    %695 = vmatpush1.msra.mxu0 0.0
    %696 = vmatprep.subr.mxu0 0.0
    %697 = vmatpush1.msra.mxu0 0.0
    %698 = vmatprep.subr.mxu0 0.0
    %699 = vmatpush1.msra.mxu0 0.0
    %700 = vmatprep.subr.mxu0 0.0
    %701 = vmatpush1.msra.mxu0 0.0
    %702 = vmatprep.subr.mxu0 0.0
    %703 = vmatpush1.msra.mxu0 0.0
    %704 = vmatprep.subr.mxu0 0.0
    %705 = vmatpush1.msra.mxu0 0.0
    %706 = vmatprep.subr.mxu0 0.0
    %707 = vmatpush1.msra.mxu0 0.0
    %708 = vmatprep.subr.mxu0 0.0
    %709 = vmatpush1.msra.mxu0 0.0
    %710 = vmatprep.subr.mxu0 0.0
    %711 = vmatpush1.msra.mxu0 0.0
    %712 = vmatprep.subr.mxu0 0.0
    %713 = vmatpush1.msra.mxu0 0.0
    %714 = vmatprep.subr.mxu0 0.0
    %715 = vmatpush1.msra.mxu0 0.0
    %716 = vmatprep.subr.mxu0 0.0
    %717 = vmatpush1.msra.mxu0 0.0
    %718 = vmatprep.subr.mxu0 %v600
    %719 = vmatpush1.msra.mxu0 %v599
    %720 = vmatprep.subr.mxu0 %v597
    %721 = vmatpush1.msra.mxu0 %v596
    %722 = vmatprep.subr.mxu0 %v594
    %723 = vmatpush1.msra.mxu0 %v593
    %724 = vmatprep.subr.mxu0 %v591
    %725 = vmatpush1.msra.mxu0 %v590
    %726 = vmatprep.subr.mxu0 0.0
    %727 = vmatpush2.msra.mxu0 0.0
    %728 = vmatprep.subr.mxu0 0.0
    %729 = vmatpush2.msra.mxu0 0.0
    %730 = vmatprep.subr.mxu0 0.0
    %731 = vmatpush2.msra.mxu0 0.0
    %732 = vmatprep.subr.mxu0 0.0
    %733 = vmatpush2.msra.mxu0 0.0
    %734 = vmatprep.subr.mxu0 0.0
    %735 = vmatpush2.msra.mxu0 0.0
    %736 = vmatprep.subr.mxu0 0.0
    %737 = vmatpush2.msra.mxu0 0.0
    %738 = vmatprep.subr.mxu0 0.0
    %739 = vmatpush2.msra.mxu0 0.0
    %740 = vmatprep.subr.mxu0 0.0
    %741 = vmatpush2.msra.mxu0 0.0
    %742 = vmatprep.subr.mxu0 0.0
    %743 = vmatpush2.msra.mxu0 0.0
    %744 = vmatprep.subr.mxu0 0.0
    %745 = vmatpush2.msra.mxu0 0.0
    %746 = vmatprep.subr.mxu0 0.0
    %747 = vmatpush2.msra.mxu0 0.0
    %748 = vmatprep.subr.mxu0 0.0
    %749 = vmatpush2.msra.mxu0 0.0
    %750 = vmatprep.subr.mxu0 0.0
    %751 = vmatpush2.msra.mxu0 0.0
    %752 = vmatprep.subr.mxu0 0.0
    %753 = vmatpush2.msra.mxu0 0.0
    %754 = vmatprep.subr.mxu0 0.0
    %755 = vmatpush2.msra.mxu0 0.0
    %756 = vmatprep.subr.mxu0 0.0
    %757 = vmatpush2.msra.mxu0 0.0
    %758 = vmatprep.mubr.f32.mxu0 0.0
    %759 = vmatmul.mubr.f32.gmra.mxu0 %v621
    %v760 = vpop.f32.mrf.mxu0
    %v761 = vadd.f32 %v690, %v760
    %v762 = vpop.f32.mrf.mxu0
    %v763 = vadd.f32 %v692, %v762
    %764 = vdwg.mxu0
    %765 = vmatprep.subr.mxu0 0.0
    %766 = vmatpush1.msra.mxu0 %v541
    %767 = vmatprep.subr.mxu0 0.0
    %768 = vmatpush1.msra.mxu0 %v538
    %769 = vmatprep.subr.mxu0 0.0
    %770 = vmatpush1.msra.mxu0 %v535
    %771 = vmatprep.subr.mxu0 0.0
    %772 = vmatpush1.msra.mxu0 %v532
    %773 = vmatprep.subr.mxu0 0.0
    %774 = vmatpush1.msra.mxu0 %v529
    %775 = vmatprep.subr.mxu0 0.0
    %776 = vmatpush1.msra.mxu0 %v526
    %777 = vmatprep.subr.mxu0 0.0
    %778 = vmatpush1.msra.mxu0 %v523
    %779 = vmatprep.subr.mxu0 0.0
    %780 = vmatpush1.msra.mxu0 %v520
    %781 = vmatprep.subr.mxu0 0.0
    %782 = vmatpush1.msra.mxu0 %v517
    %783 = vmatprep.subr.mxu0 0.0
    %784 = vmatpush1.msra.mxu0 %v514
    %785 = vmatprep.subr.mxu0 0.0
    %786 = vmatpush1.msra.mxu0 %v511
    %787 = vmatprep.subr.mxu0 0.0
    %788 = vmatpush1.msra.mxu0 %v508
    %789 = vmatprep.subr.mxu0 0.0
    %790 = vmatpush1.msra.mxu0 %v505
    %791 = vmatprep.subr.mxu0 0.0
    %792 = vmatpush1.msra.mxu0 %v502
    %793 = vmatprep.subr.mxu0 0.0
    %794 = vmatpush1.msra.mxu0 %v499
    %795 = vmatprep.subr.mxu0 0.0
    %796 = vmatpush1.msra.mxu0 %v496
    %797 = vmatprep.subr.mxu0 0.0
    %798 = vmatpush2.msra.mxu0 %v589
    %799 = vmatprep.subr.mxu0 0.0
    %800 = vmatpush2.msra.mxu0 %v586
    %801 = vmatprep.subr.mxu0 0.0
    %802 = vmatpush2.msra.mxu0 %v583
    %803 = vmatprep.subr.mxu0 0.0
    %804 = vmatpush2.msra.mxu0 %v580
    %805 = vmatprep.subr.mxu0 0.0
    %806 = vmatpush2.msra.mxu0 %v577
    %807 = vmatprep.subr.mxu0 0.0
    %808 = vmatpush2.msra.mxu0 %v574
    %809 = vmatprep.subr.mxu0 0.0
    %810 = vmatpush2.msra.mxu0 %v571
    %811 = vmatprep.subr.mxu0 0.0
    %812 = vmatpush2.msra.mxu0 %v568
    %813 = vmatprep.subr.mxu0 0.0
    %814 = vmatpush2.msra.mxu0 %v565
    %815 = vmatprep.subr.mxu0 0.0
    %816 = vmatpush2.msra.mxu0 %v562
    %817 = vmatprep.subr.mxu0 0.0
    %818 = vmatpush2.msra.mxu0 %v559
    %819 = vmatprep.subr.mxu0 0.0
    %820 = vmatpush2.msra.mxu0 %v556
    %821 = vmatprep.subr.mxu0 0.0
    %822 = vmatpush2.msra.mxu0 %v553
    %823 = vmatprep.subr.mxu0 0.0
    %824 = vmatpush2.msra.mxu0 %v550
    %825 = vmatprep.subr.mxu0 0.0
    %826 = vmatpush2.msra.mxu0 %v547
    %827 = vmatprep.subr.mxu0 0.0
    %828 = vmatpush2.msra.mxu0 %v544
    %829 = vmatprep.mubr.f32.mxu0 %v491
    %830 = vmatmul.mubr.f32.gmra.mxu0 %v490
    %v831 = vpop.f32.mrf.mxu0
    %v832 = vadd.f32 %v616, %v831
    %v833 = vpop.f32.mrf.mxu0
    %834 = vdwg.mxu0
    %835 = vmatprep.subr.mxu0 0.0
    %836 = vmatpush1.msra.mxu0 0.0
    %837 = vmatprep.subr.mxu0 0.0
    %838 = vmatpush1.msra.mxu0 0.0
    %839 = vmatprep.subr.mxu0 0.0
    %840 = vmatpush1.msra.mxu0 0.0
    %841 = vmatprep.subr.mxu0 0.0
    %842 = vmatpush1.msra.mxu0 0.0
    %843 = vmatprep.subr.mxu0 0.0
    %844 = vmatpush1.msra.mxu0 0.0
    %845 = vmatprep.subr.mxu0 0.0
    %846 = vmatpush1.msra.mxu0 0.0
    %847 = vmatprep.subr.mxu0 0.0
    %848 = vmatpush1.msra.mxu0 0.0
    %849 = vmatprep.subr.mxu0 0.0
    %850 = vmatpush1.msra.mxu0 0.0
    %851 = vmatprep.subr.mxu0 0.0
    %852 = vmatpush1.msra.mxu0 0.0
    %853 = vmatprep.subr.mxu0 0.0
    %854 = vmatpush1.msra.mxu0 0.0
    %855 = vmatprep.subr.mxu0 0.0
    %856 = vmatpush1.msra.mxu0 0.0
    %857 = vmatprep.subr.mxu0 0.0
    %858 = vmatpush1.msra.mxu0 0.0
    %859 = vmatprep.subr.mxu0 0.0
    %860 = vmatpush1.msra.mxu0 %v601
    %861 = vmatprep.subr.mxu0 0.0
    %862 = vmatpush1.msra.mxu0 %v598
    %863 = vmatprep.subr.mxu0 0.0
    %864 = vmatpush1.msra.mxu0 %v595
    %865 = vmatprep.subr.mxu0 0.0
    %866 = vmatpush1.msra.mxu0 %v592
    %867 = vmatprep.subr.mxu0 0.0
    %868 = vmatpush2.msra.mxu0 0.0
    %869 = vmatprep.subr.mxu0 0.0
    %870 = vmatpush2.msra.mxu0 0.0
    %871 = vmatprep.subr.mxu0 0.0
    %872 = vmatpush2.msra.mxu0 0.0
    %873 = vmatprep.subr.mxu0 0.0
    %874 = vmatpush2.msra.mxu0 0.0
    %875 = vmatprep.subr.mxu0 0.0
    %876 = vmatpush2.msra.mxu0 0.0
    %877 = vmatprep.subr.mxu0 0.0
    %878 = vmatpush2.msra.mxu0 0.0
    %879 = vmatprep.subr.mxu0 0.0
    %880 = vmatpush2.msra.mxu0 0.0
    %881 = vmatprep.subr.mxu0 0.0
    %882 = vmatpush2.msra.mxu0 0.0
    %883 = vmatprep.subr.mxu0 0.0
    %884 = vmatpush2.msra.mxu0 0.0
    %885 = vmatprep.subr.mxu0 0.0
    %886 = vmatpush2.msra.mxu0 0.0
    %887 = vmatprep.subr.mxu0 0.0
    %888 = vmatpush2.msra.mxu0 0.0
    %889 = vmatprep.subr.mxu0 0.0
    %890 = vmatpush2.msra.mxu0 0.0
    %891 = vmatprep.subr.mxu0 0.0
    %892 = vmatpush2.msra.mxu0 0.0
    %893 = vmatprep.subr.mxu0 0.0
    %894 = vmatpush2.msra.mxu0 0.0
    %895 = vmatprep.subr.mxu0 0.0
    %896 = vmatpush2.msra.mxu0 0.0
    %897 = vmatprep.subr.mxu0 0.0
    %898 = vmatpush2.msra.mxu0 0.0
    %899 = vmatprep.mubr.f32.mxu0 0.0
    %900 = vmatmul.mubr.f32.gmra.mxu0 %v621
    %v901 = vpop.f32.mrf.mxu0
    %v902 = vadd.f32 %v832, %v901
    %v903 = vpop.f32.mrf.mxu0
    %904 = vdwg.mxu0
    %v905 = vmax.f32 %v761, 0.0
    %v906 = vmax.f32 %v763, 0.0
    %v907 = vmax.f32 %v902, 0.0
    %s908 = scalar_lea.vmem [#allocation2], 1728
    %v909 = vld [vmem:[%s908] sm:$0xff]
    %v910 = vld [vmem:[%s908 + $0x8] sm:$0xff]
    %v911 = vld [vmem:[%s908 + $0x10] sm:$0xff]
    %v912 = vld [vmem:[%s908 + $0x18] sm:$0xff]
    %v913 = vld [vmem:[%s908 + $0x20] sm:$0xff]
    %v914 = vld [vmem:[%s908 + $0x28] sm:$0xff]
    %v915 = vld [vmem:[%s908 + $0x30] sm:$0xff]
    %v916 = vld [vmem:[%s908 + $0x38] sm:$0xff]
    %v917 = vld [vmem:[%s908 + $0x40] sm:$0xff]
    %v918 = vld [vmem:[%s908 + $0x48] sm:$0xff]
    %v919 = vld [vmem:[%s908 + $0x50] sm:$0xff]
    %v920 = vld [vmem:[%s908 + $0x58] sm:$0xff]
    %v921 = vld [vmem:[%s908 + $0x60] sm:$0xff]
    %v922 = vld [vmem:[%s908 + $0x68] sm:$0xff]
    %v923 = vld [vmem:[%s908 + $0x70] sm:$0xff]
    %v924 = vld [vmem:[%s908 + $0x78] sm:$0xff]
    %v925 = vld [vmem:[%s908 + $0x80] sm:$0xff]
    %v926 = vld [vmem:[%s908 + $0x88] sm:$0xff]
    %v927 = vld [vmem:[%s908 + $0x90] sm:$0xff]
    %v928 = vld [vmem:[%s908 + $0x98] sm:$0xff]
    %v929 = vld [vmem:[%s908 + $0xa0] sm:$0xff]
    %v930 = vld [vmem:[%s908 + $0xa8] sm:$0xff]
    %v931 = vld [vmem:[%s908 + $0xb0] sm:$0xff]
    %v932 = vld [vmem:[%s908 + $0xb8] sm:$0xff]
    %v933 = vld [vmem:[%s908 + $0xc0] sm:$0xff]
    %v934 = vld [vmem:[%s908 + $0xc8] sm:$0xff]
    %v935 = vld [vmem:[%s908 + $0xd0] sm:$0xff]
    %v936 = vld [vmem:[%s908 + $0xd8] sm:$0xff]
    %v937 = vld [vmem:[%s908 + $0xe0] sm:$0xff]
    %v938 = vld [vmem:[%s908 + $0xe8] sm:$0xff]
    %v939 = vld [vmem:[%s908 + $0xf0] sm:$0xff]
    %v940 = vld [vmem:[%s908 + $0xf8] sm:$0xff]
    %v941 = vld [vmem:[%s908 + $0x100] sm:$0xff]
    %v942 = vld [vmem:[%s908 + $0x108] sm:$0xff]
    %v943 = vld [vmem:[%s908 + $0x110] sm:$0xff]
    %v944 = vld [vmem:[%s908 + $0x118] sm:$0xff]
    %v945 = vld [vmem:[%s908 + $0x120] sm:$0xff]
    %v946 = vld [vmem:[%s908 + $0x128] sm:$0xff]
    %v947 = vld [vmem:[%s908 + $0x130] sm:$0xff]
    %v948 = vld [vmem:[%s908 + $0x138] sm:$0xff]
    %v949 = vld [vmem:[%s908 + $0x140] sm:$0xff]
    %v950 = vld [vmem:[%s908 + $0x148] sm:$0xff]
    %v951 = vld [vmem:[%s908 + $0x150] sm:$0xff]
    %v952 = vld [vmem:[%s908 + $0x158] sm:$0xff]
    %v953 = vld [vmem:[%s908 + $0x160] sm:$0xff]
    %v954 = vld [vmem:[%s908 + $0x168] sm:$0xff]
    %v955 = vld [vmem:[%s908 + $0x170] sm:$0xff]
    %v956 = vld [vmem:[%s908 + $0x178] sm:$0xff]
    %v957 = vld [vmem:[%s908 + $0x180] sm:$0xff]
    %v958 = vld [vmem:[%s908 + $0x188] sm:$0xff]
    %v959 = vld [vmem:[%s908 + $0x190] sm:$0xff]
    %v960 = vld [vmem:[%s908 + $0x198] sm:$0xff]
    %v961 = vld [vmem:[%s908 + $0x1a0] sm:$0xff]
    %v962 = vld [vmem:[%s908 + $0x1a8] sm:$0xff]
    %v963 = vld [vmem:[%s908 + $0x1b0] sm:$0xff]
    %v964 = vld [vmem:[%s908 + $0x1b8] sm:$0xff]
    %v965 = vld [vmem:[%s908 + $0x1c0] sm:$0xff]
    %v966 = vld [vmem:[%s908 + $0x1c8] sm:$0xff]
    %v967 = vld [vmem:[%s908 + $0x1d0] sm:$0xff]
    %v968 = vld [vmem:[%s908 + $0x1d8] sm:$0xff]
    %v969 = vld [vmem:[%s908 + $0x1e0] sm:$0xff]
    %v970 = vld [vmem:[%s908 + $0x1e8] sm:$0xff]
    %v971 = vld [vmem:[%s908 + $0x1f0] sm:$0xff]
    %v972 = vld [vmem:[%s908 + $0x1f8] sm:$0xff]
    %v973 = vld [vmem:[%s908 + $0x200] sm:$0xff]
    %v974 = vld [vmem:[%s908 + $0x208] sm:$0xff]
    %v975 = vld [vmem:[%s908 + $0x210] sm:$0xff]
    %v976 = vld [vmem:[%s908 + $0x218] sm:$0xff]
    %v977 = vld [vmem:[%s908 + $0x220] sm:$0xff]
    %v978 = vld [vmem:[%s908 + $0x228] sm:$0xff]
    %v979 = vld [vmem:[%s908 + $0x230] sm:$0xff]
    %v980 = vld [vmem:[%s908 + $0x238] sm:$0xff]
    %v981 = vld [vmem:[%s908 + $0x240] sm:$0xff]
    %v982 = vld [vmem:[%s908 + $0x248] sm:$0xff]
    %v983 = vld [vmem:[%s908 + $0x250] sm:$0xff]
    %v984 = vld [vmem:[%s908 + $0x258] sm:$0xff]
    %v985 = vld [vmem:[%s908 + $0x260] sm:$0xff]
    %v986 = vld [vmem:[%s908 + $0x268] sm:$0xff]
    %v987 = vld [vmem:[%s908 + $0x270] sm:$0xff]
    %v988 = vld [vmem:[%s908 + $0x278] sm:$0xff]
    %v989 = vld [vmem:[%s908 + $0x280] sm:$0xff]
    %v990 = vld [vmem:[%s908 + $0x288] sm:$0xff]
    %v991 = vld [vmem:[%s908 + $0x290] sm:$0xff]
    %v992 = vld [vmem:[%s908 + $0x298] sm:$0xff]
    %v993 = vld [vmem:[%s908 + $0x2a0] sm:$0xff]
    %v994 = vld [vmem:[%s908 + $0x2a8] sm:$0xff]
    %v995 = vld [vmem:[%s908 + $0x2b0] sm:$0xff]
    %v996 = vld [vmem:[%s908 + $0x2b8] sm:$0xff]
    %v997 = vld [vmem:[%s908 + $0x2c0] sm:$0xff]
    %v998 = vld [vmem:[%s908 + $0x2c8] sm:$0xff]
    %v999 = vld [vmem:[%s908 + $0x2d0] sm:$0xff]
    %v1000 = vld [vmem:[%s908 + $0x2d8] sm:$0xff]
    %v1001 = vld [vmem:[%s908 + $0x2e0] sm:$0xff]
    %v1002 = vld [vmem:[%s908 + $0x2e8] sm:$0xff]
    %v1003 = vld [vmem:[%s908 + $0x2f0] sm:$0xff]
    %v1004 = vld [vmem:[%s908 + $0x2f8] sm:$0xff]
    %v1005 = vld [vmem:[%s908 + $0x300] sm:$0xff]
    %v1006 = vld [vmem:[%s908 + $0x308] sm:$0xff]
    %v1007 = vld [vmem:[%s908 + $0x310] sm:$0xff]
    %v1008 = vld [vmem:[%s908 + $0x318] sm:$0xff]
    %v1009 = vld [vmem:[%s908 + $0x320] sm:$0xff]
    %v1010 = vld [vmem:[%s908 + $0x328] sm:$0xff]
    %v1011 = vld [vmem:[%s908 + $0x330] sm:$0xff]
    %v1012 = vld [vmem:[%s908 + $0x338] sm:$0xff]
    %v1013 = vld [vmem:[%s908 + $0x340] sm:$0xff]
    %v1014 = vld [vmem:[%s908 + $0x348] sm:$0xff]
    %v1015 = vld [vmem:[%s908 + $0x350] sm:$0xff]
    %v1016 = vld [vmem:[%s908 + $0x358] sm:$0xff]
    %s1017 = scalar_lea.vmem [#allocation4], 6
    %v1018 = vld [vmem:[%s1017] sm:$0x7]
    %v1020 = vlaneseq
    %v1021 = vshrl.u32 %v1020, 7
    %v1022 = vsub.s32 0, %v1021
    %v1023 = vrot.slane %v1018, %v1022
    %v1024 = vlaneseq
    %v1025 = vshrl.u32 %v1024, 7
    %v1026 = vsub.s32 1, %v1025
    %v1027 = vrot.slane %v1018, %v1026
    %v1028 = vlaneseq
    %v1029 = vshrl.u32 %v1028, 7
    %v1030 = vsub.s32 2, %v1029
    %v1031 = vrot.slane %v1018, %v1030
    %v1036 = vsel %vm204, %v907, 0
    %1038 = vmatprep.subr.mxu0 %v955
    %1039 = vmatpush1.msra.mxu0 %v954
    %1040 = vmatprep.subr.mxu0 %v952
    %1041 = vmatpush1.msra.mxu0 %v951
    %1042 = vmatprep.subr.mxu0 %v949
    %1043 = vmatpush1.msra.mxu0 %v948
    %1044 = vmatprep.subr.mxu0 %v946
    %1045 = vmatpush1.msra.mxu0 %v945
    %1046 = vmatprep.subr.mxu0 %v943
    %1047 = vmatpush1.msra.mxu0 %v942
    %1048 = vmatprep.subr.mxu0 %v940
    %1049 = vmatpush1.msra.mxu0 %v939
    %1050 = vmatprep.subr.mxu0 %v937
    %1051 = vmatpush1.msra.mxu0 %v936
    %1052 = vmatprep.subr.mxu0 %v934
    %1053 = vmatpush1.msra.mxu0 %v933
    %1054 = vmatprep.subr.mxu0 %v931
    %1055 = vmatpush1.msra.mxu0 %v930
    %1056 = vmatprep.subr.mxu0 %v928
    %1057 = vmatpush1.msra.mxu0 %v927
    %1058 = vmatprep.subr.mxu0 %v925
    %1059 = vmatpush1.msra.mxu0 %v924
    %1060 = vmatprep.subr.mxu0 %v922
    %1061 = vmatpush1.msra.mxu0 %v921
    %1062 = vmatprep.subr.mxu0 %v919
    %1063 = vmatpush1.msra.mxu0 %v918
    %1064 = vmatprep.subr.mxu0 %v916
    %1065 = vmatpush1.msra.mxu0 %v915
    %1066 = vmatprep.subr.mxu0 %v913
    %1067 = vmatpush1.msra.mxu0 %v912
    %1068 = vmatprep.subr.mxu0 %v910
    %1069 = vmatpush1.msra.mxu0 %v909
    %1070 = vmatprep.subr.mxu0 %v1003
    %1071 = vmatpush2.msra.mxu0 %v1002
    %1072 = vmatprep.subr.mxu0 %v1000
    %1073 = vmatpush2.msra.mxu0 %v999
    %1074 = vmatprep.subr.mxu0 %v997
    %1075 = vmatpush2.msra.mxu0 %v996
    %1076 = vmatprep.subr.mxu0 %v994
    %1077 = vmatpush2.msra.mxu0 %v993
    %1078 = vmatprep.subr.mxu0 %v991
    %1079 = vmatpush2.msra.mxu0 %v990
    %1080 = vmatprep.subr.mxu0 %v988
    %1081 = vmatpush2.msra.mxu0 %v987
    %1082 = vmatprep.subr.mxu0 %v985
    %1083 = vmatpush2.msra.mxu0 %v984
    %1084 = vmatprep.subr.mxu0 %v982
    %1085 = vmatpush2.msra.mxu0 %v981
    %1086 = vmatprep.subr.mxu0 %v979
    %1087 = vmatpush2.msra.mxu0 %v978
    %1088 = vmatprep.subr.mxu0 %v976
    %1089 = vmatpush2.msra.mxu0 %v975
    %1090 = vmatprep.subr.mxu0 %v973
    %1091 = vmatpush2.msra.mxu0 %v972
    %1092 = vmatprep.subr.mxu0 %v970
    %1093 = vmatpush2.msra.mxu0 %v969
    %1094 = vmatprep.subr.mxu0 %v967
    %1095 = vmatpush2.msra.mxu0 %v966
    %1096 = vmatprep.subr.mxu0 %v964
    %1097 = vmatpush2.msra.mxu0 %v963
    %1098 = vmatprep.subr.mxu0 %v961
    %1099 = vmatpush2.msra.mxu0 %v960
    %1100 = vmatprep.subr.mxu0 %v958
    %1101 = vmatpush2.msra.mxu0 %v957
    %1102 = vmatprep.mubr.f32.mxu0 %v906
    %1103 = vmatmul.mubr.f32.gmra.mxu0 %v905
    %v1104 = vpop.f32.mrf.mxu0
    %v1105 = vadd.f32 %v1023, %v1104
    %v1106 = vpop.f32.mrf.mxu0
    %v1107 = vadd.f32 %v1027, %v1106
    %1108 = vdwg.mxu0
    %1109 = vmatprep.subr.mxu0 0.0
    %1110 = vmatpush1.msra.mxu0 0.0
    %1111 = vmatprep.subr.mxu0 0.0
    %1112 = vmatpush1.msra.mxu0 0.0
    %1113 = vmatprep.subr.mxu0 0.0
    %1114 = vmatpush1.msra.mxu0 0.0
    %1115 = vmatprep.subr.mxu0 0.0
    %1116 = vmatpush1.msra.mxu0 0.0
    %1117 = vmatprep.subr.mxu0 0.0
    %1118 = vmatpush1.msra.mxu0 0.0
    %1119 = vmatprep.subr.mxu0 0.0
    %1120 = vmatpush1.msra.mxu0 0.0
    %1121 = vmatprep.subr.mxu0 0.0
    %1122 = vmatpush1.msra.mxu0 0.0
    %1123 = vmatprep.subr.mxu0 0.0
    %1124 = vmatpush1.msra.mxu0 0.0
    %1125 = vmatprep.subr.mxu0 0.0
    %1126 = vmatpush1.msra.mxu0 0.0
    %1127 = vmatprep.subr.mxu0 0.0
    %1128 = vmatpush1.msra.mxu0 0.0
    %1129 = vmatprep.subr.mxu0 0.0
    %1130 = vmatpush1.msra.mxu0 0.0
    %1131 = vmatprep.subr.mxu0 0.0
    %1132 = vmatpush1.msra.mxu0 0.0
    %1133 = vmatprep.subr.mxu0 %v1015
    %1134 = vmatpush1.msra.mxu0 %v1014
    %1135 = vmatprep.subr.mxu0 %v1012
    %1136 = vmatpush1.msra.mxu0 %v1011
    %1137 = vmatprep.subr.mxu0 %v1009
    %1138 = vmatpush1.msra.mxu0 %v1008
    %1139 = vmatprep.subr.mxu0 %v1006
    %1140 = vmatpush1.msra.mxu0 %v1005
    %1141 = vmatprep.subr.mxu0 0.0
    %1142 = vmatpush2.msra.mxu0 0.0
    %1143 = vmatprep.subr.mxu0 0.0
    %1144 = vmatpush2.msra.mxu0 0.0
    %1145 = vmatprep.subr.mxu0 0.0
    %1146 = vmatpush2.msra.mxu0 0.0
    %1147 = vmatprep.subr.mxu0 0.0
    %1148 = vmatpush2.msra.mxu0 0.0
    %1149 = vmatprep.subr.mxu0 0.0
    %1150 = vmatpush2.msra.mxu0 0.0
    %1151 = vmatprep.subr.mxu0 0.0
    %1152 = vmatpush2.msra.mxu0 0.0
    %1153 = vmatprep.subr.mxu0 0.0
    %1154 = vmatpush2.msra.mxu0 0.0
    %1155 = vmatprep.subr.mxu0 0.0
    %1156 = vmatpush2.msra.mxu0 0.0
    %1157 = vmatprep.subr.mxu0 0.0
    %1158 = vmatpush2.msra.mxu0 0.0
    %1159 = vmatprep.subr.mxu0 0.0
    %1160 = vmatpush2.msra.mxu0 0.0
    %1161 = vmatprep.subr.mxu0 0.0
    %1162 = vmatpush2.msra.mxu0 0.0
    %1163 = vmatprep.subr.mxu0 0.0
    %1164 = vmatpush2.msra.mxu0 0.0
    %1165 = vmatprep.subr.mxu0 0.0
    %1166 = vmatpush2.msra.mxu0 0.0
    %1167 = vmatprep.subr.mxu0 0.0
    %1168 = vmatpush2.msra.mxu0 0.0
    %1169 = vmatprep.subr.mxu0 0.0
    %1170 = vmatpush2.msra.mxu0 0.0
    %1171 = vmatprep.subr.mxu0 0.0
    %1172 = vmatpush2.msra.mxu0 0.0
    %1173 = vmatprep.mubr.f32.mxu0 0.0
    %1174 = vmatmul.mubr.f32.gmra.mxu0 %v1036
    %v1175 = vpop.f32.mrf.mxu0
    %v1176 = vadd.f32 %v1105, %v1175
    %v1177 = vpop.f32.mrf.mxu0
    %v1178 = vadd.f32 %v1107, %v1177
    %1179 = vdwg.mxu0
    %1180 = vmatprep.subr.mxu0 0.0
    %1181 = vmatpush1.msra.mxu0 %v956
    %1182 = vmatprep.subr.mxu0 0.0
    %1183 = vmatpush1.msra.mxu0 %v953
    %1184 = vmatprep.subr.mxu0 0.0
    %1185 = vmatpush1.msra.mxu0 %v950
    %1186 = vmatprep.subr.mxu0 0.0
    %1187 = vmatpush1.msra.mxu0 %v947
    %1188 = vmatprep.subr.mxu0 0.0
    %1189 = vmatpush1.msra.mxu0 %v944
    %1190 = vmatprep.subr.mxu0 0.0
    %1191 = vmatpush1.msra.mxu0 %v941
    %1192 = vmatprep.subr.mxu0 0.0
    %1193 = vmatpush1.msra.mxu0 %v938
    %1194 = vmatprep.subr.mxu0 0.0
    %1195 = vmatpush1.msra.mxu0 %v935
    %1196 = vmatprep.subr.mxu0 0.0
    %1197 = vmatpush1.msra.mxu0 %v932
    %1198 = vmatprep.subr.mxu0 0.0
    %1199 = vmatpush1.msra.mxu0 %v929
    %1200 = vmatprep.subr.mxu0 0.0
    %1201 = vmatpush1.msra.mxu0 %v926
    %1202 = vmatprep.subr.mxu0 0.0
    %1203 = vmatpush1.msra.mxu0 %v923
    %1204 = vmatprep.subr.mxu0 0.0
    %1205 = vmatpush1.msra.mxu0 %v920
    %1206 = vmatprep.subr.mxu0 0.0
    %1207 = vmatpush1.msra.mxu0 %v917
    %1208 = vmatprep.subr.mxu0 0.0
    %1209 = vmatpush1.msra.mxu0 %v914
    %1210 = vmatprep.subr.mxu0 0.0
    %1211 = vmatpush1.msra.mxu0 %v911
    %1212 = vmatprep.subr.mxu0 0.0
    %1213 = vmatpush2.msra.mxu0 %v1004
    %1214 = vmatprep.subr.mxu0 0.0
    %1215 = vmatpush2.msra.mxu0 %v1001
    %1216 = vmatprep.subr.mxu0 0.0
    %1217 = vmatpush2.msra.mxu0 %v998
    %1218 = vmatprep.subr.mxu0 0.0
    %1219 = vmatpush2.msra.mxu0 %v995
    %1220 = vmatprep.subr.mxu0 0.0
    %1221 = vmatpush2.msra.mxu0 %v992
    %1222 = vmatprep.subr.mxu0 0.0
    %1223 = vmatpush2.msra.mxu0 %v989
    %1224 = vmatprep.subr.mxu0 0.0
    %1225 = vmatpush2.msra.mxu0 %v986
    %1226 = vmatprep.subr.mxu0 0.0
    %1227 = vmatpush2.msra.mxu0 %v983
    %1228 = vmatprep.subr.mxu0 0.0
    %1229 = vmatpush2.msra.mxu0 %v980
    %1230 = vmatprep.subr.mxu0 0.0
    %1231 = vmatpush2.msra.mxu0 %v977
    %1232 = vmatprep.subr.mxu0 0.0
    %1233 = vmatpush2.msra.mxu0 %v974
    %1234 = vmatprep.subr.mxu0 0.0
    %1235 = vmatpush2.msra.mxu0 %v971
    %1236 = vmatprep.subr.mxu0 0.0
    %1237 = vmatpush2.msra.mxu0 %v968
    %1238 = vmatprep.subr.mxu0 0.0
    %1239 = vmatpush2.msra.mxu0 %v965
    %1240 = vmatprep.subr.mxu0 0.0
    %1241 = vmatpush2.msra.mxu0 %v962
    %1242 = vmatprep.subr.mxu0 0.0
    %1243 = vmatpush2.msra.mxu0 %v959
    %1244 = vmatprep.mubr.f32.mxu0 %v906
    %1245 = vmatmul.mubr.f32.gmra.mxu0 %v905
    %v1246 = vpop.f32.mrf.mxu0
    %v1247 = vadd.f32 %v1031, %v1246
    %v1248 = vpop.f32.mrf.mxu0
    %1249 = vdwg.mxu0
    %1250 = vmatprep.subr.mxu0 0.0
    %1251 = vmatpush1.msra.mxu0 0.0
    %1252 = vmatprep.subr.mxu0 0.0
    %1253 = vmatpush1.msra.mxu0 0.0
    %1254 = vmatprep.subr.mxu0 0.0
    %1255 = vmatpush1.msra.mxu0 0.0
    %1256 = vmatprep.subr.mxu0 0.0
    %1257 = vmatpush1.msra.mxu0 0.0
    %1258 = vmatprep.subr.mxu0 0.0
    %1259 = vmatpush1.msra.mxu0 0.0
    %1260 = vmatprep.subr.mxu0 0.0
    %1261 = vmatpush1.msra.mxu0 0.0
    %1262 = vmatprep.subr.mxu0 0.0
    %1263 = vmatpush1.msra.mxu0 0.0
    %1264 = vmatprep.subr.mxu0 0.0
    %1265 = vmatpush1.msra.mxu0 0.0
    %1266 = vmatprep.subr.mxu0 0.0
    %1267 = vmatpush1.msra.mxu0 0.0
    %1268 = vmatprep.subr.mxu0 0.0
    %1269 = vmatpush1.msra.mxu0 0.0
    %1270 = vmatprep.subr.mxu0 0.0
    %1271 = vmatpush1.msra.mxu0 0.0
    %1272 = vmatprep.subr.mxu0 0.0
    %1273 = vmatpush1.msra.mxu0 0.0
    %1274 = vmatprep.subr.mxu0 0.0
    %1275 = vmatpush1.msra.mxu0 %v1016
    %1276 = vmatprep.subr.mxu0 0.0
    %1277 = vmatpush1.msra.mxu0 %v1013
    %1278 = vmatprep.subr.mxu0 0.0
    %1279 = vmatpush1.msra.mxu0 %v1010
    %1280 = vmatprep.subr.mxu0 0.0
    %1281 = vmatpush1.msra.mxu0 %v1007
    %1282 = vmatprep.subr.mxu0 0.0
    %1283 = vmatpush2.msra.mxu0 0.0
    %1284 = vmatprep.subr.mxu0 0.0
    %1285 = vmatpush2.msra.mxu0 0.0
    %1286 = vmatprep.subr.mxu0 0.0
    %1287 = vmatpush2.msra.mxu0 0.0
    %1288 = vmatprep.subr.mxu0 0.0
    %1289 = vmatpush2.msra.mxu0 0.0
    %1290 = vmatprep.subr.mxu0 0.0
    %1291 = vmatpush2.msra.mxu0 0.0
    %1292 = vmatprep.subr.mxu0 0.0
    %1293 = vmatpush2.msra.mxu0 0.0
    %1294 = vmatprep.subr.mxu0 0.0
    %1295 = vmatpush2.msra.mxu0 0.0
    %1296 = vmatprep.subr.mxu0 0.0
    %1297 = vmatpush2.msra.mxu0 0.0
    %1298 = vmatprep.subr.mxu0 0.0
    %1299 = vmatpush2.msra.mxu0 0.0
    %1300 = vmatprep.subr.mxu0 0.0
    %1301 = vmatpush2.msra.mxu0 0.0
    %1302 = vmatprep.subr.mxu0 0.0
    %1303 = vmatpush2.msra.mxu0 0.0
    %1304 = vmatprep.subr.mxu0 0.0
    %1305 = vmatpush2.msra.mxu0 0.0
    %1306 = vmatprep.subr.mxu0 0.0
    %1307 = vmatpush2.msra.mxu0 0.0
    %1308 = vmatprep.subr.mxu0 0.0
    %1309 = vmatpush2.msra.mxu0 0.0
    %1310 = vmatprep.subr.mxu0 0.0
    %1311 = vmatpush2.msra.mxu0 0.0
    %1312 = vmatprep.subr.mxu0 0.0
    %1313 = vmatpush2.msra.mxu0 0.0
    %1314 = vmatprep.mubr.f32.mxu0 0.0
    %1315 = vmatmul.mubr.f32.gmra.mxu0 %v1036
    %v1316 = vpop.f32.mrf.mxu0
    %v1317 = vadd.f32 %v1247, %v1316
    %v1318 = vpop.f32.mrf.mxu0
    %1319 = vdwg.mxu0
    %v1320 = vmax.f32 %v1176, 0.0
    %v1321 = vmax.f32 %v1178, 0.0
    %v1322 = vmax.f32 %v1317, 0.0
    %s1323 = scalar_lea.vmem [#allocation2], 2592
    %v1324 = vld [vmem:[%s1323] sm:$0xff]
    %v1325 = vld [vmem:[%s1323 + $0x8] sm:$0xff]
    %v1326 = vld [vmem:[%s1323 + $0x10] sm:$0xff]
    %v1327 = vld [vmem:[%s1323 + $0x18] sm:$0xff]
    %v1328 = vld [vmem:[%s1323 + $0x20] sm:$0xff]
    %v1329 = vld [vmem:[%s1323 + $0x28] sm:$0xff]
    %v1330 = vld [vmem:[%s1323 + $0x30] sm:$0xff]
    %v1331 = vld [vmem:[%s1323 + $0x38] sm:$0xff]
    %v1332 = vld [vmem:[%s1323 + $0x40] sm:$0xff]
    %v1333 = vld [vmem:[%s1323 + $0x48] sm:$0xff]
    %v1334 = vld [vmem:[%s1323 + $0x50] sm:$0xff]
    %v1335 = vld [vmem:[%s1323 + $0x58] sm:$0xff]
    %v1336 = vld [vmem:[%s1323 + $0x60] sm:$0xff]
    %v1337 = vld [vmem:[%s1323 + $0x68] sm:$0xff]
    %v1338 = vld [vmem:[%s1323 + $0x70] sm:$0xff]
    %v1339 = vld [vmem:[%s1323 + $0x78] sm:$0xff]
    %v1340 = vld [vmem:[%s1323 + $0x80] sm:$0xff]
    %v1341 = vld [vmem:[%s1323 + $0x88] sm:$0xff]
    %v1342 = vld [vmem:[%s1323 + $0x90] sm:$0xff]
    %v1343 = vld [vmem:[%s1323 + $0x98] sm:$0xff]
    %v1344 = vld [vmem:[%s1323 + $0xa0] sm:$0xff]
    %v1345 = vld [vmem:[%s1323 + $0xa8] sm:$0xff]
    %v1346 = vld [vmem:[%s1323 + $0xb0] sm:$0xff]
    %v1347 = vld [vmem:[%s1323 + $0xb8] sm:$0xff]
    %v1348 = vld [vmem:[%s1323 + $0xc0] sm:$0xff]
    %v1349 = vld [vmem:[%s1323 + $0xc8] sm:$0xff]
    %v1350 = vld [vmem:[%s1323 + $0xd0] sm:$0xff]
    %v1351 = vld [vmem:[%s1323 + $0xd8] sm:$0xff]
    %v1352 = vld [vmem:[%s1323 + $0xe0] sm:$0xff]
    %v1353 = vld [vmem:[%s1323 + $0xe8] sm:$0xff]
    %v1354 = vld [vmem:[%s1323 + $0xf0] sm:$0xff]
    %v1355 = vld [vmem:[%s1323 + $0xf8] sm:$0xff]
    %v1356 = vld [vmem:[%s1323 + $0x100] sm:$0xff]
    %v1357 = vld [vmem:[%s1323 + $0x108] sm:$0xff]
    %v1358 = vld [vmem:[%s1323 + $0x110] sm:$0xff]
    %v1359 = vld [vmem:[%s1323 + $0x118] sm:$0xff]
    %v1360 = vld [vmem:[%s1323 + $0x120] sm:$0xff]
    %v1361 = vld [vmem:[%s1323 + $0x128] sm:$0xff]
    %v1362 = vld [vmem:[%s1323 + $0x130] sm:$0xff]
    %v1363 = vld [vmem:[%s1323 + $0x138] sm:$0xff]
    %v1364 = vld [vmem:[%s1323 + $0x140] sm:$0xff]
    %v1365 = vld [vmem:[%s1323 + $0x148] sm:$0xff]
    %v1366 = vld [vmem:[%s1323 + $0x150] sm:$0xff]
    %v1367 = vld [vmem:[%s1323 + $0x158] sm:$0xff]
    %v1368 = vld [vmem:[%s1323 + $0x160] sm:$0xff]
    %v1369 = vld [vmem:[%s1323 + $0x168] sm:$0xff]
    %v1370 = vld [vmem:[%s1323 + $0x170] sm:$0xff]
    %v1371 = vld [vmem:[%s1323 + $0x178] sm:$0xff]
    %v1372 = vld [vmem:[%s1323 + $0x180] sm:$0xff]
    %v1373 = vld [vmem:[%s1323 + $0x188] sm:$0xff]
    %v1374 = vld [vmem:[%s1323 + $0x190] sm:$0xff]
    %v1375 = vld [vmem:[%s1323 + $0x198] sm:$0xff]
    %v1376 = vld [vmem:[%s1323 + $0x1a0] sm:$0xff]
    %v1377 = vld [vmem:[%s1323 + $0x1a8] sm:$0xff]
    %v1378 = vld [vmem:[%s1323 + $0x1b0] sm:$0xff]
    %v1379 = vld [vmem:[%s1323 + $0x1b8] sm:$0xff]
    %v1380 = vld [vmem:[%s1323 + $0x1c0] sm:$0xff]
    %v1381 = vld [vmem:[%s1323 + $0x1c8] sm:$0xff]
    %v1382 = vld [vmem:[%s1323 + $0x1d0] sm:$0xff]
    %v1383 = vld [vmem:[%s1323 + $0x1d8] sm:$0xff]
    %v1384 = vld [vmem:[%s1323 + $0x1e0] sm:$0xff]
    %v1385 = vld [vmem:[%s1323 + $0x1e8] sm:$0xff]
    %v1386 = vld [vmem:[%s1323 + $0x1f0] sm:$0xff]
    %v1387 = vld [vmem:[%s1323 + $0x1f8] sm:$0xff]
    %v1388 = vld [vmem:[%s1323 + $0x200] sm:$0xff]
    %v1389 = vld [vmem:[%s1323 + $0x208] sm:$0xff]
    %v1390 = vld [vmem:[%s1323 + $0x210] sm:$0xff]
    %v1391 = vld [vmem:[%s1323 + $0x218] sm:$0xff]
    %v1392 = vld [vmem:[%s1323 + $0x220] sm:$0xff]
    %v1393 = vld [vmem:[%s1323 + $0x228] sm:$0xff]
    %v1394 = vld [vmem:[%s1323 + $0x230] sm:$0xff]
    %v1395 = vld [vmem:[%s1323 + $0x238] sm:$0xff]
    %v1396 = vld [vmem:[%s1323 + $0x240] sm:$0xff]
    %v1397 = vld [vmem:[%s1323 + $0x248] sm:$0xff]
    %v1398 = vld [vmem:[%s1323 + $0x250] sm:$0xff]
    %v1399 = vld [vmem:[%s1323 + $0x258] sm:$0xff]
    %v1400 = vld [vmem:[%s1323 + $0x260] sm:$0xff]
    %v1401 = vld [vmem:[%s1323 + $0x268] sm:$0xff]
    %v1402 = vld [vmem:[%s1323 + $0x270] sm:$0xff]
    %v1403 = vld [vmem:[%s1323 + $0x278] sm:$0xff]
    %v1404 = vld [vmem:[%s1323 + $0x280] sm:$0xff]
    %v1405 = vld [vmem:[%s1323 + $0x288] sm:$0xff]
    %v1406 = vld [vmem:[%s1323 + $0x290] sm:$0xff]
    %v1407 = vld [vmem:[%s1323 + $0x298] sm:$0xff]
    %v1408 = vld [vmem:[%s1323 + $0x2a0] sm:$0xff]
    %v1409 = vld [vmem:[%s1323 + $0x2a8] sm:$0xff]
    %v1410 = vld [vmem:[%s1323 + $0x2b0] sm:$0xff]
    %v1411 = vld [vmem:[%s1323 + $0x2b8] sm:$0xff]
    %v1412 = vld [vmem:[%s1323 + $0x2c0] sm:$0xff]
    %v1413 = vld [vmem:[%s1323 + $0x2c8] sm:$0xff]
    %v1414 = vld [vmem:[%s1323 + $0x2d0] sm:$0xff]
    %v1415 = vld [vmem:[%s1323 + $0x2d8] sm:$0xff]
    %v1416 = vld [vmem:[%s1323 + $0x2e0] sm:$0xff]
    %v1417 = vld [vmem:[%s1323 + $0x2e8] sm:$0xff]
    %v1418 = vld [vmem:[%s1323 + $0x2f0] sm:$0xff]
    %v1419 = vld [vmem:[%s1323 + $0x2f8] sm:$0xff]
    %v1420 = vld [vmem:[%s1323 + $0x300] sm:$0xff]
    %v1421 = vld [vmem:[%s1323 + $0x308] sm:$0xff]
    %v1422 = vld [vmem:[%s1323 + $0x310] sm:$0xff]
    %v1423 = vld [vmem:[%s1323 + $0x318] sm:$0xff]
    %v1424 = vld [vmem:[%s1323 + $0x320] sm:$0xff]
    %v1425 = vld [vmem:[%s1323 + $0x328] sm:$0xff]
    %v1426 = vld [vmem:[%s1323 + $0x330] sm:$0xff]
    %v1427 = vld [vmem:[%s1323 + $0x338] sm:$0xff]
    %v1428 = vld [vmem:[%s1323 + $0x340] sm:$0xff]
    %v1429 = vld [vmem:[%s1323 + $0x348] sm:$0xff]
    %v1430 = vld [vmem:[%s1323 + $0x350] sm:$0xff]
    %v1431 = vld [vmem:[%s1323 + $0x358] sm:$0xff]
    %s1432 = scalar_lea.vmem [#allocation4], 9
    %v1433 = vld [vmem:[%s1432] sm:$0x7]
    %v1435 = vlaneseq
    %v1436 = vshrl.u32 %v1435, 7
    %v1437 = vsub.s32 0, %v1436
    %v1438 = vrot.slane %v1433, %v1437
    %v1439 = vlaneseq
    %v1440 = vshrl.u32 %v1439, 7
    %v1441 = vsub.s32 1, %v1440
    %v1442 = vrot.slane %v1433, %v1441
    %v1443 = vlaneseq
    %v1444 = vshrl.u32 %v1443, 7
    %v1445 = vsub.s32 2, %v1444
    %v1446 = vrot.slane %v1433, %v1445
    %v1451 = vsel %vm204, %v1322, 0
    %1453 = vmatprep.subr.mxu0 %v1370
    %1454 = vmatpush1.msra.mxu0 %v1369
    %1455 = vmatprep.subr.mxu0 %v1367
    %1456 = vmatpush1.msra.mxu0 %v1366
    %1457 = vmatprep.subr.mxu0 %v1364
    %1458 = vmatpush1.msra.mxu0 %v1363
    %1459 = vmatprep.subr.mxu0 %v1361
    %1460 = vmatpush1.msra.mxu0 %v1360
    %1461 = vmatprep.subr.mxu0 %v1358
    %1462 = vmatpush1.msra.mxu0 %v1357
    %1463 = vmatprep.subr.mxu0 %v1355
    %1464 = vmatpush1.msra.mxu0 %v1354
    %1465 = vmatprep.subr.mxu0 %v1352
    %1466 = vmatpush1.msra.mxu0 %v1351
    %1467 = vmatprep.subr.mxu0 %v1349
    %1468 = vmatpush1.msra.mxu0 %v1348
    %1469 = vmatprep.subr.mxu0 %v1346
    %1470 = vmatpush1.msra.mxu0 %v1345
    %1471 = vmatprep.subr.mxu0 %v1343
    %1472 = vmatpush1.msra.mxu0 %v1342
    %1473 = vmatprep.subr.mxu0 %v1340
    %1474 = vmatpush1.msra.mxu0 %v1339
    %1475 = vmatprep.subr.mxu0 %v1337
    %1476 = vmatpush1.msra.mxu0 %v1336
    %1477 = vmatprep.subr.mxu0 %v1334
    %1478 = vmatpush1.msra.mxu0 %v1333
    %1479 = vmatprep.subr.mxu0 %v1331
    %1480 = vmatpush1.msra.mxu0 %v1330
    %1481 = vmatprep.subr.mxu0 %v1328
    %1482 = vmatpush1.msra.mxu0 %v1327
    %1483 = vmatprep.subr.mxu0 %v1325
    %1484 = vmatpush1.msra.mxu0 %v1324
    %1485 = vmatprep.subr.mxu0 %v1418
    %1486 = vmatpush2.msra.mxu0 %v1417
    %1487 = vmatprep.subr.mxu0 %v1415
    %1488 = vmatpush2.msra.mxu0 %v1414
    %1489 = vmatprep.subr.mxu0 %v1412
    %1490 = vmatpush2.msra.mxu0 %v1411
    %1491 = vmatprep.subr.mxu0 %v1409
    %1492 = vmatpush2.msra.mxu0 %v1408
    %1493 = vmatprep.subr.mxu0 %v1406
    %1494 = vmatpush2.msra.mxu0 %v1405
    %1495 = vmatprep.subr.mxu0 %v1403
    %1496 = vmatpush2.msra.mxu0 %v1402
    %1497 = vmatprep.subr.mxu0 %v1400
    %1498 = vmatpush2.msra.mxu0 %v1399
    %1499 = vmatprep.subr.mxu0 %v1397
    %1500 = vmatpush2.msra.mxu0 %v1396
    %1501 = vmatprep.subr.mxu0 %v1394
    %1502 = vmatpush2.msra.mxu0 %v1393
    %1503 = vmatprep.subr.mxu0 %v1391
    %1504 = vmatpush2.msra.mxu0 %v1390
    %1505 = vmatprep.subr.mxu0 %v1388
    %1506 = vmatpush2.msra.mxu0 %v1387
    %1507 = vmatprep.subr.mxu0 %v1385
    %1508 = vmatpush2.msra.mxu0 %v1384
    %1509 = vmatprep.subr.mxu0 %v1382
    %1510 = vmatpush2.msra.mxu0 %v1381
    %1511 = vmatprep.subr.mxu0 %v1379
    %1512 = vmatpush2.msra.mxu0 %v1378
    %1513 = vmatprep.subr.mxu0 %v1376
    %1514 = vmatpush2.msra.mxu0 %v1375
    %1515 = vmatprep.subr.mxu0 %v1373
    %1516 = vmatpush2.msra.mxu0 %v1372
    %1517 = vmatprep.mubr.f32.mxu0 %v1321
    %1518 = vmatmul.mubr.f32.gmra.mxu0 %v1320
    %v1519 = vpop.f32.mrf.mxu0
    %v1520 = vadd.f32 %v1438, %v1519
    %v1521 = vpop.f32.mrf.mxu0
    %v1522 = vadd.f32 %v1442, %v1521
    %1523 = vdwg.mxu0
    %1524 = vmatprep.subr.mxu0 0.0
    %1525 = vmatpush1.msra.mxu0 0.0
    %1526 = vmatprep.subr.mxu0 0.0
    %1527 = vmatpush1.msra.mxu0 0.0
    %1528 = vmatprep.subr.mxu0 0.0
    %1529 = vmatpush1.msra.mxu0 0.0
    %1530 = vmatprep.subr.mxu0 0.0
    %1531 = vmatpush1.msra.mxu0 0.0
    %1532 = vmatprep.subr.mxu0 0.0
    %1533 = vmatpush1.msra.mxu0 0.0
    %1534 = vmatprep.subr.mxu0 0.0
    %1535 = vmatpush1.msra.mxu0 0.0
    %1536 = vmatprep.subr.mxu0 0.0
    %1537 = vmatpush1.msra.mxu0 0.0
    %1538 = vmatprep.subr.mxu0 0.0
    %1539 = vmatpush1.msra.mxu0 0.0
    %1540 = vmatprep.subr.mxu0 0.0
    %1541 = vmatpush1.msra.mxu0 0.0
    %1542 = vmatprep.subr.mxu0 0.0
    %1543 = vmatpush1.msra.mxu0 0.0
    %1544 = vmatprep.subr.mxu0 0.0
    %1545 = vmatpush1.msra.mxu0 0.0
    %1546 = vmatprep.subr.mxu0 0.0
    %1547 = vmatpush1.msra.mxu0 0.0
    %1548 = vmatprep.subr.mxu0 %v1430
    %1549 = vmatpush1.msra.mxu0 %v1429
    %1550 = vmatprep.subr.mxu0 %v1427
    %1551 = vmatpush1.msra.mxu0 %v1426
    %1552 = vmatprep.subr.mxu0 %v1424
    %1553 = vmatpush1.msra.mxu0 %v1423
    %1554 = vmatprep.subr.mxu0 %v1421
    %1555 = vmatpush1.msra.mxu0 %v1420
    %1556 = vmatprep.subr.mxu0 0.0
    %1557 = vmatpush2.msra.mxu0 0.0
    %1558 = vmatprep.subr.mxu0 0.0
    %1559 = vmatpush2.msra.mxu0 0.0
    %1560 = vmatprep.subr.mxu0 0.0
    %1561 = vmatpush2.msra.mxu0 0.0
    %1562 = vmatprep.subr.mxu0 0.0
    %1563 = vmatpush2.msra.mxu0 0.0
    %1564 = vmatprep.subr.mxu0 0.0
    %1565 = vmatpush2.msra.mxu0 0.0
    %1566 = vmatprep.subr.mxu0 0.0
    %1567 = vmatpush2.msra.mxu0 0.0
    %1568 = vmatprep.subr.mxu0 0.0
    %1569 = vmatpush2.msra.mxu0 0.0
    %1570 = vmatprep.subr.mxu0 0.0
    %1571 = vmatpush2.msra.mxu0 0.0
    %1572 = vmatprep.subr.mxu0 0.0
    %1573 = vmatpush2.msra.mxu0 0.0
    %1574 = vmatprep.subr.mxu0 0.0
    %1575 = vmatpush2.msra.mxu0 0.0
    %1576 = vmatprep.subr.mxu0 0.0
    %1577 = vmatpush2.msra.mxu0 0.0
    %1578 = vmatprep.subr.mxu0 0.0
    %1579 = vmatpush2.msra.mxu0 0.0
    %1580 = vmatprep.subr.mxu0 0.0
    %1581 = vmatpush2.msra.mxu0 0.0
    %1582 = vmatprep.subr.mxu0 0.0
    %1583 = vmatpush2.msra.mxu0 0.0
    %1584 = vmatprep.subr.mxu0 0.0
    %1585 = vmatpush2.msra.mxu0 0.0
    %1586 = vmatprep.subr.mxu0 0.0
    %1587 = vmatpush2.msra.mxu0 0.0
    %1588 = vmatprep.mubr.f32.mxu0 0.0
    %1589 = vmatmul.mubr.f32.gmra.mxu0 %v1451
    %v1590 = vpop.f32.mrf.mxu0
    %v1591 = vadd.f32 %v1520, %v1590
    %v1592 = vpop.f32.mrf.mxu0
    %v1593 = vadd.f32 %v1522, %v1592
    %1594 = vdwg.mxu0
    %1595 = vmatprep.subr.mxu0 0.0
    %1596 = vmatpush1.msra.mxu0 %v1371
    %1597 = vmatprep.subr.mxu0 0.0
    %1598 = vmatpush1.msra.mxu0 %v1368
    %1599 = vmatprep.subr.mxu0 0.0
    %1600 = vmatpush1.msra.mxu0 %v1365
    %1601 = vmatprep.subr.mxu0 0.0
    %1602 = vmatpush1.msra.mxu0 %v1362
    %1603 = vmatprep.subr.mxu0 0.0
    %1604 = vmatpush1.msra.mxu0 %v1359
    %1605 = vmatprep.subr.mxu0 0.0
    %1606 = vmatpush1.msra.mxu0 %v1356
    %1607 = vmatprep.subr.mxu0 0.0
    %1608 = vmatpush1.msra.mxu0 %v1353
    %1609 = vmatprep.subr.mxu0 0.0
    %1610 = vmatpush1.msra.mxu0 %v1350
    %1611 = vmatprep.subr.mxu0 0.0
    %1612 = vmatpush1.msra.mxu0 %v1347
    %1613 = vmatprep.subr.mxu0 0.0
    %1614 = vmatpush1.msra.mxu0 %v1344
    %1615 = vmatprep.subr.mxu0 0.0
    %1616 = vmatpush1.msra.mxu0 %v1341
    %1617 = vmatprep.subr.mxu0 0.0
    %1618 = vmatpush1.msra.mxu0 %v1338
    %1619 = vmatprep.subr.mxu0 0.0
    %1620 = vmatpush1.msra.mxu0 %v1335
    %1621 = vmatprep.subr.mxu0 0.0
    %1622 = vmatpush1.msra.mxu0 %v1332
    %1623 = vmatprep.subr.mxu0 0.0
    %1624 = vmatpush1.msra.mxu0 %v1329
    %1625 = vmatprep.subr.mxu0 0.0
    %1626 = vmatpush1.msra.mxu0 %v1326
    %1627 = vmatprep.subr.mxu0 0.0
    %1628 = vmatpush2.msra.mxu0 %v1419
    %1629 = vmatprep.subr.mxu0 0.0
    %1630 = vmatpush2.msra.mxu0 %v1416
    %1631 = vmatprep.subr.mxu0 0.0
    %1632 = vmatpush2.msra.mxu0 %v1413
    %1633 = vmatprep.subr.mxu0 0.0
    %1634 = vmatpush2.msra.mxu0 %v1410
    %1635 = vmatprep.subr.mxu0 0.0
    %1636 = vmatpush2.msra.mxu0 %v1407
    %1637 = vmatprep.subr.mxu0 0.0
    %1638 = vmatpush2.msra.mxu0 %v1404
    %1639 = vmatprep.subr.mxu0 0.0
    %1640 = vmatpush2.msra.mxu0 %v1401
    %1641 = vmatprep.subr.mxu0 0.0
    %1642 = vmatpush2.msra.mxu0 %v1398
    %1643 = vmatprep.subr.mxu0 0.0
    %1644 = vmatpush2.msra.mxu0 %v1395
    %1645 = vmatprep.subr.mxu0 0.0
    %1646 = vmatpush2.msra.mxu0 %v1392
    %1647 = vmatprep.subr.mxu0 0.0
    %1648 = vmatpush2.msra.mxu0 %v1389
    %1649 = vmatprep.subr.mxu0 0.0
    %1650 = vmatpush2.msra.mxu0 %v1386
    %1651 = vmatprep.subr.mxu0 0.0
    %1652 = vmatpush2.msra.mxu0 %v1383
    %1653 = vmatprep.subr.mxu0 0.0
    %1654 = vmatpush2.msra.mxu0 %v1380
    %1655 = vmatprep.subr.mxu0 0.0
    %1656 = vmatpush2.msra.mxu0 %v1377
    %1657 = vmatprep.subr.mxu0 0.0
    %1658 = vmatpush2.msra.mxu0 %v1374
    %1659 = vmatprep.mubr.f32.mxu0 %v1321
    %1660 = vmatmul.mubr.f32.gmra.mxu0 %v1320
    %v1661 = vpop.f32.mrf.mxu0
    %v1662 = vadd.f32 %v1446, %v1661
    %v1663 = vpop.f32.mrf.mxu0
    %1664 = vdwg.mxu0
    %1665 = vmatprep.subr.mxu0 0.0
    %1666 = vmatpush1.msra.mxu0 0.0
    %1667 = vmatprep.subr.mxu0 0.0
    %1668 = vmatpush1.msra.mxu0 0.0
    %1669 = vmatprep.subr.mxu0 0.0
    %1670 = vmatpush1.msra.mxu0 0.0
    %1671 = vmatprep.subr.mxu0 0.0
    %1672 = vmatpush1.msra.mxu0 0.0
    %1673 = vmatprep.subr.mxu0 0.0
    %1674 = vmatpush1.msra.mxu0 0.0
    %1675 = vmatprep.subr.mxu0 0.0
    %1676 = vmatpush1.msra.mxu0 0.0
    %1677 = vmatprep.subr.mxu0 0.0
    %1678 = vmatpush1.msra.mxu0 0.0
    %1679 = vmatprep.subr.mxu0 0.0
    %1680 = vmatpush1.msra.mxu0 0.0
    %1681 = vmatprep.subr.mxu0 0.0
    %1682 = vmatpush1.msra.mxu0 0.0
    %1683 = vmatprep.subr.mxu0 0.0
    %1684 = vmatpush1.msra.mxu0 0.0
    %1685 = vmatprep.subr.mxu0 0.0
    %1686 = vmatpush1.msra.mxu0 0.0
    %1687 = vmatprep.subr.mxu0 0.0
    %1688 = vmatpush1.msra.mxu0 0.0
    %1689 = vmatprep.subr.mxu0 0.0
    %1690 = vmatpush1.msra.mxu0 %v1431
    %1691 = vmatprep.subr.mxu0 0.0
    %1692 = vmatpush1.msra.mxu0 %v1428
    %1693 = vmatprep.subr.mxu0 0.0
    %1694 = vmatpush1.msra.mxu0 %v1425
    %1695 = vmatprep.subr.mxu0 0.0
    %1696 = vmatpush1.msra.mxu0 %v1422
    %1697 = vmatprep.subr.mxu0 0.0
    %1698 = vmatpush2.msra.mxu0 0.0
    %1699 = vmatprep.subr.mxu0 0.0
    %1700 = vmatpush2.msra.mxu0 0.0
    %1701 = vmatprep.subr.mxu0 0.0
    %1702 = vmatpush2.msra.mxu0 0.0
    %1703 = vmatprep.subr.mxu0 0.0
    %1704 = vmatpush2.msra.mxu0 0.0
    %1705 = vmatprep.subr.mxu0 0.0
    %1706 = vmatpush2.msra.mxu0 0.0
    %1707 = vmatprep.subr.mxu0 0.0
    %1708 = vmatpush2.msra.mxu0 0.0
    %1709 = vmatprep.subr.mxu0 0.0
    %1710 = vmatpush2.msra.mxu0 0.0
    %1711 = vmatprep.subr.mxu0 0.0
    %1712 = vmatpush2.msra.mxu0 0.0
    %1713 = vmatprep.subr.mxu0 0.0
    %1714 = vmatpush2.msra.mxu0 0.0
    %1715 = vmatprep.subr.mxu0 0.0
    %1716 = vmatpush2.msra.mxu0 0.0
    %1717 = vmatprep.subr.mxu0 0.0
    %1718 = vmatpush2.msra.mxu0 0.0
    %1719 = vmatprep.subr.mxu0 0.0
    %1720 = vmatpush2.msra.mxu0 0.0
    %1721 = vmatprep.subr.mxu0 0.0
    %1722 = vmatpush2.msra.mxu0 0.0
    %1723 = vmatprep.subr.mxu0 0.0
    %1724 = vmatpush2.msra.mxu0 0.0
    %1725 = vmatprep.subr.mxu0 0.0
    %1726 = vmatpush2.msra.mxu0 0.0
    %1727 = vmatprep.subr.mxu0 0.0
    %1728 = vmatpush2.msra.mxu0 0.0
    %1729 = vmatprep.mubr.f32.mxu0 0.0
    %1730 = vmatmul.mubr.f32.gmra.mxu0 %v1451
    %v1731 = vpop.f32.mrf.mxu0
    %v1732 = vadd.f32 %v1662, %v1731
    %v1733 = vpop.f32.mrf.mxu0
    %1734 = vdwg.mxu0
    %v1735 = vmax.f32 %v1591, 0.0
    %v1736 = vmax.f32 %v1593, 0.0
    %v1737 = vmax.f32 %v1732, 0.0
    %v1738 = vld [vmem:[%s3] sm:$0xff]
    %v1739 = vld [vmem:[%s3 + $0x8] sm:$0xff]
    %v1740 = vld [vmem:[%s3 + $0x10] sm:$0xff]
    %v1741 = vld [vmem:[%s3 + $0x18] sm:$0xff]
    %v1742 = vld [vmem:[%s3 + $0x20] sm:$0xff]
    %v1743 = vld [vmem:[%s3 + $0x28] sm:$0xff]
    %v1744 = vld [vmem:[%s3 + $0x30] sm:$0xff]
    %v1745 = vld [vmem:[%s3 + $0x38] sm:$0xff]
    %v1746 = vld [vmem:[%s3 + $0x40] sm:$0xff]
    %v1747 = vld [vmem:[%s3 + $0x48] sm:$0xff]
    %v1748 = vld [vmem:[%s3 + $0x50] sm:$0xff]
    %v1749 = vld [vmem:[%s3 + $0x58] sm:$0xff]
    %v1750 = vld [vmem:[%s3 + $0x60] sm:$0xff]
    %v1751 = vld [vmem:[%s3 + $0x68] sm:$0xff]
    %v1752 = vld [vmem:[%s3 + $0x70] sm:$0xff]
    %v1753 = vld [vmem:[%s3 + $0x78] sm:$0xff]
    %v1754 = vld [vmem:[%s3 + $0x80] sm:$0xff]
    %v1755 = vld [vmem:[%s3 + $0x88] sm:$0xff]
    %v1756 = vld [vmem:[%s3 + $0x90] sm:$0xff]
    %v1757 = vld [vmem:[%s3 + $0x98] sm:$0xff]
    %v1758 = vld [vmem:[%s3 + $0xa0] sm:$0xff]
    %v1759 = vld [vmem:[%s3 + $0xa8] sm:$0xff]
    %v1760 = vld [vmem:[%s3 + $0xb0] sm:$0xff]
    %v1761 = vld [vmem:[%s3 + $0xb8] sm:$0xff]
    %v1762 = vld [vmem:[%s3 + $0xc0] sm:$0xff]
    %v1763 = vld [vmem:[%s3 + $0xc8] sm:$0xff]
    %v1764 = vld [vmem:[%s3 + $0xd0] sm:$0xff]
    %v1765 = vld [vmem:[%s3 + $0xd8] sm:$0xff]
    %v1766 = vld [vmem:[%s3 + $0xe0] sm:$0xff]
    %v1767 = vld [vmem:[%s3 + $0xe8] sm:$0xff]
    %v1768 = vld [vmem:[%s3 + $0xf0] sm:$0xff]
    %v1769 = vld [vmem:[%s3 + $0xf8] sm:$0xff]
    %v1770 = vld [vmem:[%s3 + $0x100] sm:$0xff]
    %v1771 = vld [vmem:[%s3 + $0x108] sm:$0xff]
    %v1772 = vld [vmem:[%s3 + $0x110] sm:$0xff]
    %v1773 = vld [vmem:[%s3 + $0x118] sm:$0xff]
    %v1774 = vld [vmem:[#allocation6] sm:$0x1]
    %v1776 = vlaneseq
    %v1777 = vshrl.u32 %v1776, 7
    %v1778 = vsub.s32 0, %v1777
    %v1779 = vrot.slane %v1774, %v1778
    %v1782 = vsel %vm204, %v1737, 0
    %1784 = vmatprep.subr.mxu0 0.0
    %1785 = vmatpush1.msra.mxu0 %v1753
    %1786 = vmatprep.subr.mxu0 0.0
    %1787 = vmatpush1.msra.mxu0 %v1752
    %1788 = vmatprep.subr.mxu0 0.0
    %1789 = vmatpush1.msra.mxu0 %v1751
    %1790 = vmatprep.subr.mxu0 0.0
    %1791 = vmatpush1.msra.mxu0 %v1750
    %1792 = vmatprep.subr.mxu0 0.0
    %1793 = vmatpush1.msra.mxu0 %v1749
    %1794 = vmatprep.subr.mxu0 0.0
    %1795 = vmatpush1.msra.mxu0 %v1748
    %1796 = vmatprep.subr.mxu0 0.0
    %1797 = vmatpush1.msra.mxu0 %v1747
    %1798 = vmatprep.subr.mxu0 0.0
    %1799 = vmatpush1.msra.mxu0 %v1746
    %1800 = vmatprep.subr.mxu0 0.0
    %1801 = vmatpush1.msra.mxu0 %v1745
    %1802 = vmatprep.subr.mxu0 0.0
    %1803 = vmatpush1.msra.mxu0 %v1744
    %1804 = vmatprep.subr.mxu0 0.0
    %1805 = vmatpush1.msra.mxu0 %v1743
    %1806 = vmatprep.subr.mxu0 0.0
    %1807 = vmatpush1.msra.mxu0 %v1742
    %1808 = vmatprep.subr.mxu0 0.0
    %1809 = vmatpush1.msra.mxu0 %v1741
    %1810 = vmatprep.subr.mxu0 0.0
    %1811 = vmatpush1.msra.mxu0 %v1740
    %1812 = vmatprep.subr.mxu0 0.0
    %1813 = vmatpush1.msra.mxu0 %v1739
    %1814 = vmatprep.subr.mxu0 0.0
    %1815 = vmatpush1.msra.mxu0 %v1738
    %1816 = vmatprep.subr.mxu0 0.0
    %1817 = vmatpush2.msra.mxu0 %v1769
    %1818 = vmatprep.subr.mxu0 0.0
    %1819 = vmatpush2.msra.mxu0 %v1768
    %1820 = vmatprep.subr.mxu0 0.0
    %1821 = vmatpush2.msra.mxu0 %v1767
    %1822 = vmatprep.subr.mxu0 0.0
    %1823 = vmatpush2.msra.mxu0 %v1766
    %1824 = vmatprep.subr.mxu0 0.0
    %1825 = vmatpush2.msra.mxu0 %v1765
    %1826 = vmatprep.subr.mxu0 0.0
    %1827 = vmatpush2.msra.mxu0 %v1764
    %1828 = vmatprep.subr.mxu0 0.0
    %1829 = vmatpush2.msra.mxu0 %v1763
    %1830 = vmatprep.subr.mxu0 0.0
    %1831 = vmatpush2.msra.mxu0 %v1762
    %1832 = vmatprep.subr.mxu0 0.0
    %1833 = vmatpush2.msra.mxu0 %v1761
    %1834 = vmatprep.subr.mxu0 0.0
    %1835 = vmatpush2.msra.mxu0 %v1760
    %1836 = vmatprep.subr.mxu0 0.0
    %1837 = vmatpush2.msra.mxu0 %v1759
    %1838 = vmatprep.subr.mxu0 0.0
    %1839 = vmatpush2.msra.mxu0 %v1758
    %1840 = vmatprep.subr.mxu0 0.0
    %1841 = vmatpush2.msra.mxu0 %v1757
    %1842 = vmatprep.subr.mxu0 0.0
    %1843 = vmatpush2.msra.mxu0 %v1756
    %1844 = vmatprep.subr.mxu0 0.0
    %1845 = vmatpush2.msra.mxu0 %v1755
    %1846 = vmatprep.subr.mxu0 0.0
    %1847 = vmatpush2.msra.mxu0 %v1754
    %1848 = vmatprep.mubr.f32.mxu0 %v1736
    %1849 = vmatmul.mubr.f32.gmra.mxu0 %v1735
    %v1850 = vpop.f32.mrf.mxu0
    %v1851 = vadd.f32 %v1779, %v1850
    %v1852 = vpop.f32.mrf.mxu0
    %1853 = vdwg.mxu0
    %1854 = vmatprep.subr.mxu0 0.0
    %1855 = vmatpush1.msra.mxu0 0.0
    %1856 = vmatprep.subr.mxu0 0.0
    %1857 = vmatpush1.msra.mxu0 0.0
    %1858 = vmatprep.subr.mxu0 0.0
    %1859 = vmatpush1.msra.mxu0 0.0
    %1860 = vmatprep.subr.mxu0 0.0
    %1861 = vmatpush1.msra.mxu0 0.0
    %1862 = vmatprep.subr.mxu0 0.0
    %1863 = vmatpush1.msra.mxu0 0.0
    %1864 = vmatprep.subr.mxu0 0.0
    %1865 = vmatpush1.msra.mxu0 0.0
    %1866 = vmatprep.subr.mxu0 0.0
    %1867 = vmatpush1.msra.mxu0 0.0
    %1868 = vmatprep.subr.mxu0 0.0
    %1869 = vmatpush1.msra.mxu0 0.0
    %1870 = vmatprep.subr.mxu0 0.0
    %1871 = vmatpush1.msra.mxu0 0.0
    %1872 = vmatprep.subr.mxu0 0.0
    %1873 = vmatpush1.msra.mxu0 0.0
    %1874 = vmatprep.subr.mxu0 0.0
    %1875 = vmatpush1.msra.mxu0 0.0
    %1876 = vmatprep.subr.mxu0 0.0
    %1877 = vmatpush1.msra.mxu0 0.0
    %1878 = vmatprep.subr.mxu0 0.0
    %1879 = vmatpush1.msra.mxu0 %v1773
    %1880 = vmatprep.subr.mxu0 0.0
    %1881 = vmatpush1.msra.mxu0 %v1772
    %1882 = vmatprep.subr.mxu0 0.0
    %1883 = vmatpush1.msra.mxu0 %v1771
    %1884 = vmatprep.subr.mxu0 0.0
    %1885 = vmatpush1.msra.mxu0 %v1770
    %1886 = vmatprep.subr.mxu0 0.0
    %1887 = vmatpush2.msra.mxu0 0.0
    %1888 = vmatprep.subr.mxu0 0.0
    %1889 = vmatpush2.msra.mxu0 0.0
    %1890 = vmatprep.subr.mxu0 0.0
    %1891 = vmatpush2.msra.mxu0 0.0
    %1892 = vmatprep.subr.mxu0 0.0
    %1893 = vmatpush2.msra.mxu0 0.0
    %1894 = vmatprep.subr.mxu0 0.0
    %1895 = vmatpush2.msra.mxu0 0.0
    %1896 = vmatprep.subr.mxu0 0.0
    %1897 = vmatpush2.msra.mxu0 0.0
    %1898 = vmatprep.subr.mxu0 0.0
    %1899 = vmatpush2.msra.mxu0 0.0
    %1900 = vmatprep.subr.mxu0 0.0
    %1901 = vmatpush2.msra.mxu0 0.0
    %1902 = vmatprep.subr.mxu0 0.0
    %1903 = vmatpush2.msra.mxu0 0.0
    %1904 = vmatprep.subr.mxu0 0.0
    %1905 = vmatpush2.msra.mxu0 0.0
    %1906 = vmatprep.subr.mxu0 0.0
    %1907 = vmatpush2.msra.mxu0 0.0
    %1908 = vmatprep.subr.mxu0 0.0
    %1909 = vmatpush2.msra.mxu0 0.0
    %1910 = vmatprep.subr.mxu0 0.0
    %1911 = vmatpush2.msra.mxu0 0.0
    %1912 = vmatprep.subr.mxu0 0.0
    %1913 = vmatpush2.msra.mxu0 0.0
    %1914 = vmatprep.subr.mxu0 0.0
    %1915 = vmatpush2.msra.mxu0 0.0
    %1916 = vmatprep.subr.mxu0 0.0
    %1917 = vmatpush2.msra.mxu0 0.0
    %1918 = vmatprep.mubr.f32.mxu0 0.0
    %1919 = vmatmul.mubr.f32.gmra.mxu0 %v1782
    %v1920 = vpop.f32.mrf.mxu0
    %v1921 = vadd.f32 %v1851, %v1920
    %v1922 = vpop.f32.mrf.mxu0
    %1923 = vdwg.mxu0
    %vm1924 = vcmp.ge.f32.partialorder %v1921, 0.0
    %v1925 = vmul.f32 %v1921, 0.1
    %v1926 = vsel %vm1924, %v1921, %v1925
    %v1927 = vld [vmem:[#allocation7] sm:$0xff]
    %v1928 = vld [vmem:[#allocation7 + $0x8] sm:$0xff]
    %v1929 = vld [vmem:[#allocation7 + $0x10] sm:$0xff]
    %v1930 = vld [vmem:[#allocation7 + $0x18] sm:$0xff]
    %v1932 = vsel %vm204, %v1926, 0
    %1934 = vmatprep.subr.mxu0 0.0
    %1935 = vmatpush1.msra.mxu0 0.0
    %1936 = vmatprep.subr.mxu0 0.0
    %1937 = vmatpush1.msra.mxu0 0.0
    %1938 = vmatprep.subr.mxu0 0.0
    %1939 = vmatpush1.msra.mxu0 0.0
    %1940 = vmatprep.subr.mxu0 0.0
    %1941 = vmatpush1.msra.mxu0 0.0
    %1942 = vmatprep.subr.mxu0 0.0
    %1943 = vmatpush1.msra.mxu0 0.0
    %1944 = vmatprep.subr.mxu0 0.0
    %1945 = vmatpush1.msra.mxu0 0.0
    %1946 = vmatprep.subr.mxu0 0.0
    %1947 = vmatpush1.msra.mxu0 0.0
    %1948 = vmatprep.subr.mxu0 0.0
    %1949 = vmatpush1.msra.mxu0 0.0
    %1950 = vmatprep.subr.mxu0 0.0
    %1951 = vmatpush1.msra.mxu0 0.0
    %1952 = vmatprep.subr.mxu0 0.0
    %1953 = vmatpush1.msra.mxu0 0.0
    %1954 = vmatprep.subr.mxu0 0.0
    %1955 = vmatpush1.msra.mxu0 0.0
    %1956 = vmatprep.subr.mxu0 0.0
    %1957 = vmatpush1.msra.mxu0 0.0
    %1958 = vmatprep.subr.mxu0 0.0
    %1959 = vmatpush1.msra.mxu0 %v1930
    %1960 = vmatprep.subr.mxu0 0.0
    %1961 = vmatpush1.msra.mxu0 %v1929
    %1962 = vmatprep.subr.mxu0 0.0
    %1963 = vmatpush1.msra.mxu0 %v1928
    %1964 = vmatprep.subr.mxu0 0.0
    %1965 = vmatpush1.msra.mxu0 %v1927
    %1966 = vmatprep.subr.mxu0 0.0
    %1967 = vmatpush2.msra.mxu0 0.0
    %1968 = vmatprep.subr.mxu0 0.0
    %1969 = vmatpush2.msra.mxu0 0.0
    %1970 = vmatprep.subr.mxu0 0.0
    %1971 = vmatpush2.msra.mxu0 0.0
    %1972 = vmatprep.subr.mxu0 0.0
    %1973 = vmatpush2.msra.mxu0 0.0
    %1974 = vmatprep.subr.mxu0 0.0
    %1975 = vmatpush2.msra.mxu0 0.0
    %1976 = vmatprep.subr.mxu0 0.0
    %1977 = vmatpush2.msra.mxu0 0.0
    %1978 = vmatprep.subr.mxu0 0.0
    %1979 = vmatpush2.msra.mxu0 0.0
    %1980 = vmatprep.subr.mxu0 0.0
    %1981 = vmatpush2.msra.mxu0 0.0
    %1982 = vmatprep.subr.mxu0 0.0
    %1983 = vmatpush2.msra.mxu0 0.0
    %1984 = vmatprep.subr.mxu0 0.0
    %1985 = vmatpush2.msra.mxu0 0.0
    %1986 = vmatprep.subr.mxu0 0.0
    %1987 = vmatpush2.msra.mxu0 0.0
    %1988 = vmatprep.subr.mxu0 0.0
    %1989 = vmatpush2.msra.mxu0 0.0
    %1990 = vmatprep.subr.mxu0 0.0
    %1991 = vmatpush2.msra.mxu0 0.0
    %1992 = vmatprep.subr.mxu0 0.0
    %1993 = vmatpush2.msra.mxu0 0.0
    %1994 = vmatprep.subr.mxu0 0.0
    %1995 = vmatpush2.msra.mxu0 0.0
    %1996 = vmatprep.subr.mxu0 0.0
    %1997 = vmatpush2.msra.mxu0 0.0
    %1998 = vmatprep.mubr.f32.mxu0 0.0
    %1999 = vmatmul.mubr.f32.gmra.mxu0 %v1932
    %v2000 = vpop.f32.mrf.mxu0
    %v2001 = vadd.f32 0.0, %v2000
    %v2002 = vpop.f32.mrf.mxu0
    %2003 = vdwg.mxu0
    %v2004 = vlaneseq
    %v2005 = vand.u32 %v2004, 127
    %vm2006 = vcmp.eq.s32.totalorder %v2005, 9
    %v2007 = vtanh.pop %v2001
    %v2008 = vsel %vm2006, %v2007, %v2001
    %2009 = vst [vmem:[%s6] sm:$0xff] %v2008
    // Predicated region
    $region42: #{forward.1} parent=1 // pred_check
      _
    $region43: #{forward.1} parent=1 // pred_check_branch
      %2011 = sbr.rel (0) target = $region45
    $region44: #{forward.1} parent=1 // pred_region
      _
    $region45: #{forward.1} parent=1 // pred_fallthru
      _
    // Predicated region
    $region46: #{forward.1} parent=1 // pred_check
      _
    $region47: #{forward.1} parent=1 // pred_check_branch
      %2013 = sbr.rel (0) target = $region49
    $region48: #{forward.1} parent=1 // pred_region
      _
    $region49: #{forward.1} parent=1 // pred_fallthru
      _
    %2014 = vsyncpa [#allocation3], 1
    %2015 = vsyncpa [#allocation5], 1
    %2016 = vsyncpa [#allocation8], 1

</llo_original>
